<compile_context>
chip_gen: v6e
topology: v6e:2x2x1
jax: 0.10.0
libtpu: 0.0.40
codegen_flags: <defaults>
</compile_context>

<pallas_src>
import math

import jax
import jax.numpy as jnp
from jax.experimental import pallas as pl
from jax.experimental.pallas import tpu as pltpu


def _round_up(n, m):
    return -(-n // m) * m


def cnn_kernel(x_ref,
               w1_ref, b1_ref,
               w2_ref, b2_ref,
               w3_ref, b3_ref,
               w4_ref, b4_ref,
               wfc_ref, bfc_ref,
               o_ref):
    # Fused pad/cast: x arrives as raw f32 [TM, 358]; cast to bf16 here (no wrapper pass).
    h = x_ref[...].astype(jnp.bfloat16)
    # conv1 (k=1) + ReLU   [TM, 358] @ [358, 512]   (un-padded K, MXU masks internally)
    h = jnp.dot(h, w1_ref[...], preferred_element_type=jnp.float32)
    h = jnp.maximum(h + b1_ref[...], 0.0).astype(jnp.bfloat16)
    # conv2 (k=1) + ReLU   [TM, 512] @ [512, 512]
    h = jnp.dot(h, w2_ref[...], preferred_element_type=jnp.float32)
    h = jnp.maximum(h + b2_ref[...], 0.0).astype(jnp.bfloat16)
    # conv3 (k=1) + ReLU   [TM, 512] @ [512, 256]
    h = jnp.dot(h, w3_ref[...], preferred_element_type=jnp.float32)
    h = jnp.maximum(h + b3_ref[...], 0.0).astype(jnp.bfloat16)
    # conv4 (k=1) + ReLU   [TM, 256] @ [256, 128]
    h = jnp.dot(h, w4_ref[...], preferred_element_type=jnp.float32)
    h = jnp.maximum(h + b4_ref[...], 0.0).astype(jnp.bfloat16)
    # fc as an MXU matmul: wfc is [128, 128] bf16 with the true Linear(100,1) row in
    # column 0 (zeros elsewhere).  Output slab stays lane-dense; sliced to [:, :1]
    # outside the kernel.
    out = jnp.dot(h, wfc_ref[...], preferred_element_type=jnp.float32) + bfc_ref[...]
    o_ref[...] = out


def _select_tiles(B, tm_cap):
    """Balanced batch tiles: >=2 tiles when B is large enough (v7x megacore), tiles
    capped at tm_cap, padding limited to < one tile (and zero for single-tile runs)."""
    n_tiles = pl.cdiv(B, tm_cap)
    if B >= 32:
        n_tiles = max(n_tiles, 2)   # give both v7x TensorCores work
    if n_tiles == 1:
        return B, B                  # single tile == full batch dim (legal, no padding)
    TM = _round_up(pl.cdiv(B, n_tiles), 8)
    B_pad = _round_up(B, TM)
    return TM, B_pad


def cnn_forward(x, params, *, tm=512):
    """x: [B, input_size] float32.  Returns [B, 1] float32 (PyTorch fc output)."""
    (w1, b1, w2, b2, w3, b3, w4, b4, wfc, bfc) = params
    B, c_in = x.shape

    TM, B_pad = _select_tiles(B, tm)
    if B_pad != B:
        # Row padding only (rare, < one tile of rows); x keeps f32 and 358 channels.
        x = jnp.pad(x, ((0, B_pad - B), (0, 0)))

    def resident(arr):  # weights/biases: same block every grid step -> DMA'd once
        return pl.BlockSpec(arr.shape, lambda i: (0, 0))

    out = pl.pallas_call(
        cnn_kernel,
        out_shape=jax.ShapeDtypeStruct((B_pad, 128), jnp.float32),
        grid_spec=pltpu.PrefetchScalarGridSpec(
            num_scalar_prefetch=0,
            grid=(B_pad // TM,),
            in_specs=[
                pl.BlockSpec((TM, c_in), lambda i: (i, 0)),   # raw f32 x tile
                resident(w1), resident(b1),
                resident(w2), resident(b2),
                resident(w3), resident(b3),
                resident(w4), resident(b4),
                resident(wfc), resident(bfc),
            ],
            out_specs=pl.BlockSpec((TM, 128), lambda i: (i, 0)),
        ),
        compiler_params=pltpu.CompilerParams(
            dimension_semantics=("parallel",)),
    )(x, w1, b1, w2, b2, w3, b3, w4, b4, wfc, bfc)
    return out[:B, :1]


def init_params(key, input_size=358, out_channels=500):
    """PyTorch-style init, stored pre-transposed ([C_in, C_out]).  conv1 keeps its
    contraction dim un-padded (358); all output channels are zero-padded to lane
    multiples (500->512, 250->256, 100->128).  Weights bf16, biases f32 (padded
    entries exactly 0).  fc is stored as a [128,128] bf16 matrix with the true
    Linear(100,1) row in column 0 so the kernel can use a single MXU matmul."""
    dims = [(input_size, out_channels),   # conv1
            (out_channels, 500),          # conv2
            (500, 250),                   # conv3
            (250, 100)]                   # conv4
    params = []
    for li, (cin, cout) in enumerate(dims):
        key, kw, kb = jax.random.split(key, 3)
        scale = 1.0 / math.sqrt(cin)
        w = jax.random.uniform(kw, (cin, cout), jnp.float32, -scale, scale)
        b = jax.random.uniform(kb, (cout,), jnp.float32, -scale, scale)
        cin_p = cin if li == 0 else _round_up(cin, 128)   # conv1: K stays 358
        cout_p = _round_up(cout, 128)
        w_p = (jnp.zeros((cin_p, cout_p), jnp.float32)
               .at[:cin, :cout].set(w).astype(jnp.bfloat16))
        b_p = jnp.zeros((1, cout_p), jnp.float32).at[0, :cout].set(b)
        params += [w_p, b_p]
    # fc: Linear(100, 1) -> column 0 of a [128, 128] bf16 matrix + bias in lane 0.
    key, kw, kb = jax.random.split(key, 3)
    scale = 1.0 / math.sqrt(100)
    wfc = jax.random.uniform(kw, (100,), jnp.float32, -scale, scale)
    bfc = jax.random.uniform(kb, (), jnp.float32, -scale, scale)
    wfc_p = (jnp.zeros((128, 128), jnp.float32)
             .at[:100, 0].set(wfc).astype(jnp.bfloat16))
    bfc_p = jnp.zeros((1, 128), jnp.float32).at[0, 0].set(bfc)
    params += [wfc_p, bfc_p]
    return tuple(params)


def ref_forward(x, params):
    """Plain-JAX reference mirroring the kernel math (bf16 weights/activations,
    f32 MXU accumulation).  Note: this validates the kernel against its own bf16
    precision choice; the original PyTorch model is pure f32."""
    (w1, b1, w2, b2, w3, b3, w4, b4, wfc, bfc) = params
    h = x.astype(jnp.bfloat16)
    for w, b in ((w1, b1), (w2, b2), (w3, b3), (w4, b4)):
        h = jnp.dot(h, w, preferred_element_type=jnp.float32)
        h = jnp.maximum(h + b, 0.0).astype(jnp.bfloat16)
    out = jnp.dot(h, wfc, preferred_element_type=jnp.float32) + bfc
    return out[:, :1]


if __name__ == "__main__":
    INPUT_SIZE = 358
    OUT_CHANNELS = 500

    key = jax.random.PRNGKey(0)
    key, kx = jax.random.split(key)
    params = init_params(key, INPUT_SIZE, OUT_CHANNELS)

    # Small-batch sanity (single full-dim tile, no padding).
    x_small = jax.random.normal(kx, (4, INPUT_SIZE), jnp.float32)
    out_small = jax.block_until_ready(cnn_forward(x_small, params))
    assert out_small.shape == (4, 1)
    assert jnp.allclose(out_small, ref_forward(x_small, params),
                        atol=2e-3, rtol=2e-3)

    # Multi-tile batch (two balanced tiles of 136 -> exercises resident weights,
    # pipelined grid and the "parallel" batch axis).
    key, kx2 = jax.random.split(key)
    x_big = jax.random.normal(kx2, (272, INPUT_SIZE), jnp.float32)
    out_big = jax.block_until_ready(cnn_forward(x_big, params))
    assert out_big.shape == (272, 1)
    assert jnp.allclose(out_big, ref_forward(x_big, params),
                        atol=2e-3, rtol=2e-3)

    # Batch that doesn't split evenly (exercises the row-padding path).
    key, kx3 = jax.random.split(key)
    x_pad = jax.random.normal(kx3, (100, INPUT_SIZE), jnp.float32)
    out_pad = jax.block_until_ready(cnn_forward(x_pad, params))
    assert out_pad.shape == (100, 1)
    assert jnp.allclose(out_pad, ref_forward(x_pad, params),
                        atol=2e-3, rtol=2e-3)

    print("KERNEL_OK")
</pallas_src>

<mosaic_0001>
module attributes {stable_mosaic.version = 11 : i64} {
  func.func @cnn_kernel(%arg0: i32, %arg1: memref<4x358xf32, #tpu.memory_space<vmem>>, %arg2: memref<358x512xbf16, #tpu.memory_space<vmem>>, %arg3: memref<1x512xf32, #tpu.memory_space<vmem>>, %arg4: memref<512x512xbf16, #tpu.memory_space<vmem>>, %arg5: memref<1x512xf32, #tpu.memory_space<vmem>>, %arg6: memref<512x256xbf16, #tpu.memory_space<vmem>>, %arg7: memref<1x256xf32, #tpu.memory_space<vmem>>, %arg8: memref<256x128xbf16, #tpu.memory_space<vmem>>, %arg9: memref<1x128xf32, #tpu.memory_space<vmem>>, %arg10: memref<128x128xbf16, #tpu.memory_space<vmem>>, %arg11: memref<1x128xf32, #tpu.memory_space<vmem>>, %arg12: memref<4x128xf32, #tpu.memory_space<vmem>>) attributes {dimension_semantics = [#tpu.dimension_semantics<parallel>], iteration_bounds = array<i64: 1>, scalar_prefetch = 0 : i64, scratch_operands = 0 : i64, tpu.core_type = #tpu.core_type<tc>, window_params = [{transform_indices = @transform_0, window_bounds = array<i64: 4, 358>}, {pipeline_mode = #tpu.pipeline_mode<synchronous>, transform_indices = @transform_1, window_bounds = array<i64: 358, 512>}, {pipeline_mode = #tpu.pipeline_mode<synchronous>, transform_indices = @transform_2, window_bounds = array<i64: 1, 512>}, {pipeline_mode = #tpu.pipeline_mode<synchronous>, transform_indices = @transform_3, window_bounds = array<i64: 512, 512>}, {pipeline_mode = #tpu.pipeline_mode<synchronous>, transform_indices = @transform_4, window_bounds = array<i64: 1, 512>}, {pipeline_mode = #tpu.pipeline_mode<synchronous>, transform_indices = @transform_5, window_bounds = array<i64: 512, 256>}, {pipeline_mode = #tpu.pipeline_mode<synchronous>, transform_indices = @transform_6, window_bounds = array<i64: 1, 256>}, {pipeline_mode = #tpu.pipeline_mode<synchronous>, transform_indices = @transform_7, window_bounds = array<i64: 256, 128>}, {pipeline_mode = #tpu.pipeline_mode<synchronous>, transform_indices = @transform_8, window_bounds = array<i64: 1, 128>}, {pipeline_mode = #tpu.pipeline_mode<synchronous>, transform_indices = @transform_9, window_bounds = array<i64: 128, 128>}, {pipeline_mode = #tpu.pipeline_mode<synchronous>, transform_indices = @transform_10, window_bounds = array<i64: 1, 128>}, {transform_indices = @transform_11, window_bounds = array<i64: 4, 128>}]} {
    %c0 = arith.constant 0 : index
    %c0_0 = arith.constant 0 : index
    %0 = vector.load %arg1[%c0, %c0_0] : memref<4x358xf32, #tpu.memory_space<vmem>>, vector<4x358xf32>
    %1 = arith.truncf %0 : vector<4x358xf32> to vector<4x358xbf16>
    %c0_1 = arith.constant 0 : index
    %c0_2 = arith.constant 0 : index
    %2 = vector.load %arg2[%c0_1, %c0_2] : memref<358x512xbf16, #tpu.memory_space<vmem>>, vector<358x512xbf16>
    %cst = arith.constant dense<0.000000e+00> : vector<4x512xf32>
    %3 = tpu.matmul %1, %2, %cst {dimension_numbers = #tpu.dot_dimension_numbers<[1], [0], [0], [1], [0, 0, 1, 1], [], []>} : vector<4x358xbf16>, vector<358x512xbf16>, vector<4x512xf32> -> vector<4x512xf32>
    %c0_3 = arith.constant 0 : index
    %c0_4 = arith.constant 0 : index
    %4 = vector.load %arg3[%c0_3, %c0_4] : memref<1x512xf32, #tpu.memory_space<vmem>>, vector<1x512xf32>
    %5 = vector.broadcast %4 : vector<1x512xf32> to vector<4x512xf32>
    %6 = arith.addf %3, %5 : vector<4x512xf32>
    %cst_5 = arith.constant 0.000000e+00 : f32
    %7 = vector.broadcast %cst_5 : f32 to vector<4x512xf32>
    %8 = arith.maximumf %6, %7 : vector<4x512xf32>
    %9 = arith.truncf %8 : vector<4x512xf32> to vector<4x512xbf16>
    %c0_6 = arith.constant 0 : index
    %c0_7 = arith.constant 0 : index
    %10 = vector.load %arg4[%c0_6, %c0_7] : memref<512x512xbf16, #tpu.memory_space<vmem>>, vector<512x512xbf16>
    %cst_8 = arith.constant dense<0.000000e+00> : vector<4x512xf32>
    %11 = tpu.matmul %9, %10, %cst_8 {dimension_numbers = #tpu.dot_dimension_numbers<[1], [0], [0], [1], [0, 0, 1, 1], [], []>} : vector<4x512xbf16>, vector<512x512xbf16>, vector<4x512xf32> -> vector<4x512xf32>
    %c0_9 = arith.constant 0 : index
    %c0_10 = arith.constant 0 : index
    %12 = vector.load %arg5[%c0_9, %c0_10] : memref<1x512xf32, #tpu.memory_space<vmem>>, vector<1x512xf32>
    %13 = vector.broadcast %12 : vector<1x512xf32> to vector<4x512xf32>
    %14 = arith.addf %11, %13 : vector<4x512xf32>
    %cst_11 = arith.constant 0.000000e+00 : f32
    %15 = vector.broadcast %cst_11 : f32 to vector<4x512xf32>
    %16 = arith.maximumf %14, %15 : vector<4x512xf32>
    %17 = arith.truncf %16 : vector<4x512xf32> to vector<4x512xbf16>
    %c0_12 = arith.constant 0 : index
    %c0_13 = arith.constant 0 : index
    %18 = vector.load %arg6[%c0_12, %c0_13] : memref<512x256xbf16, #tpu.memory_space<vmem>>, vector<512x256xbf16>
    %cst_14 = arith.constant dense<0.000000e+00> : vector<4x256xf32>
    %19 = tpu.matmul %17, %18, %cst_14 {dimension_numbers = #tpu.dot_dimension_numbers<[1], [0], [0], [1], [0, 0, 1, 1], [], []>} : vector<4x512xbf16>, vector<512x256xbf16>, vector<4x256xf32> -> vector<4x256xf32>
    %c0_15 = arith.constant 0 : index
    %c0_16 = arith.constant 0 : index
    %20 = vector.load %arg7[%c0_15, %c0_16] : memref<1x256xf32, #tpu.memory_space<vmem>>, vector<1x256xf32>
    %21 = vector.broadcast %20 : vector<1x256xf32> to vector<4x256xf32>
    %22 = arith.addf %19, %21 : vector<4x256xf32>
    %cst_17 = arith.constant 0.000000e+00 : f32
    %23 = vector.broadcast %cst_17 : f32 to vector<4x256xf32>
    %24 = arith.maximumf %22, %23 : vector<4x256xf32>
    %25 = arith.truncf %24 : vector<4x256xf32> to vector<4x256xbf16>
    %c0_18 = arith.constant 0 : index
    %c0_19 = arith.constant 0 : index
    %26 = vector.load %arg8[%c0_18, %c0_19] : memref<256x128xbf16, #tpu.memory_space<vmem>>, vector<256x128xbf16>
    %cst_20 = arith.constant dense<0.000000e+00> : vector<4x128xf32>
    %27 = tpu.matmul %25, %26, %cst_20 {dimension_numbers = #tpu.dot_dimension_numbers<[1], [0], [0], [1], [0, 0, 1, 1], [], []>} : vector<4x256xbf16>, vector<256x128xbf16>, vector<4x128xf32> -> vector<4x128xf32>
    %c0_21 = arith.constant 0 : index
    %c0_22 = arith.constant 0 : index
    %28 = vector.load %arg9[%c0_21, %c0_22] : memref<1x128xf32, #tpu.memory_space<vmem>>, vector<1x128xf32>
    %29 = vector.broadcast %28 : vector<1x128xf32> to vector<4x128xf32>
    %30 = arith.addf %27, %29 : vector<4x128xf32>
    %cst_23 = arith.constant 0.000000e+00 : f32
    %31 = vector.broadcast %cst_23 : f32 to vector<4x128xf32>
    %32 = arith.maximumf %30, %31 : vector<4x128xf32>
    %33 = arith.truncf %32 : vector<4x128xf32> to vector<4x128xbf16>
    %c0_24 = arith.constant 0 : index
    %c0_25 = arith.constant 0 : index
    %34 = vector.load %arg10[%c0_24, %c0_25] : memref<128x128xbf16, #tpu.memory_space<vmem>>, vector<128x128xbf16>
    %cst_26 = arith.constant dense<0.000000e+00> : vector<4x128xf32>
    %35 = tpu.matmul %33, %34, %cst_26 {dimension_numbers = #tpu.dot_dimension_numbers<[1], [0], [0], [1], [0, 0, 1, 1], [], []>} : vector<4x128xbf16>, vector<128x128xbf16>, vector<4x128xf32> -> vector<4x128xf32>
    %c0_27 = arith.constant 0 : index
    %c0_28 = arith.constant 0 : index
    %36 = vector.load %arg11[%c0_27, %c0_28] : memref<1x128xf32, #tpu.memory_space<vmem>>, vector<1x128xf32>
    %37 = vector.broadcast %36 : vector<1x128xf32> to vector<4x128xf32>
    %38 = arith.addf %35, %37 : vector<4x128xf32>
    %c0_29 = arith.constant 0 : index
    %c0_30 = arith.constant 0 : index
    %39 = vector.load %arg12[%c0_29, %c0_30] : memref<4x128xf32, #tpu.memory_space<vmem>>, vector<4x128xf32>
    tpu.vector_store %arg12[%c0_29, %c0_30], %38 {strides = array<i32>} : memref<4x128xf32, #tpu.memory_space<vmem>>, vector<4x128xf32>,
    return
  }
  func.func @transform_0(%arg0: i32) -> (i32, i32) {
    %c0_i32 = arith.constant 0 : i32
    %c0_i32_0 = arith.constant 0 : i32
    return %arg0, %c0_i32 : i32, i32
  }
  func.func @transform_1(%arg0: i32) -> (i32, i32) {
    %c0_i32 = arith.constant 0 : i32
    %c0_i32_0 = arith.constant 0 : i32
    %c0_i32_1 = arith.constant 0 : i32
    return %c0_i32, %c0_i32_0 : i32, i32
  }
  func.func @transform_2(%arg0: i32) -> (i32, i32) {
    %c0_i32 = arith.constant 0 : i32
    %c0_i32_0 = arith.constant 0 : i32
    %c0_i32_1 = arith.constant 0 : i32
    return %c0_i32, %c0_i32_0 : i32, i32
  }
  func.func @transform_3(%arg0: i32) -> (i32, i32) {
    %c0_i32 = arith.constant 0 : i32
    %c0_i32_0 = arith.constant 0 : i32
    %c0_i32_1 = arith.constant 0 : i32
    return %c0_i32, %c0_i32_0 : i32, i32
  }
  func.func @transform_4(%arg0: i32) -> (i32, i32) {
    %c0_i32 = arith.constant 0 : i32
    %c0_i32_0 = arith.constant 0 : i32
    %c0_i32_1 = arith.constant 0 : i32
    return %c0_i32, %c0_i32_0 : i32, i32
  }
  func.func @transform_5(%arg0: i32) -> (i32, i32) {
    %c0_i32 = arith.constant 0 : i32
    %c0_i32_0 = arith.constant 0 : i32
    %c0_i32_1 = arith.constant 0 : i32
    return %c0_i32, %c0_i32_0 : i32, i32
  }
  func.func @transform_6(%arg0: i32) -> (i32, i32) {
    %c0_i32 = arith.constant 0 : i32
    %c0_i32_0 = arith.constant 0 : i32
    %c0_i32_1 = arith.constant 0 : i32
    return %c0_i32, %c0_i32_0 : i32, i32
  }
  func.func @transform_7(%arg0: i32) -> (i32, i32) {
    %c0_i32 = arith.constant 0 : i32
    %c0_i32_0 = arith.constant 0 : i32
    %c0_i32_1 = arith.constant 0 : i32
    return %c0_i32, %c0_i32_0 : i32, i32
  }
  func.func @transform_8(%arg0: i32) -> (i32, i32) {
    %c0_i32 = arith.constant 0 : i32
    %c0_i32_0 = arith.constant 0 : i32
    %c0_i32_1 = arith.constant 0 : i32
    return %c0_i32, %c0_i32_0 : i32, i32
  }
  func.func @transform_9(%arg0: i32) -> (i32, i32) {
    %c0_i32 = arith.constant 0 : i32
    %c0_i32_0 = arith.constant 0 : i32
    %c0_i32_1 = arith.constant 0 : i32
    return %c0_i32, %c0_i32_0 : i32, i32
  }
  func.func @transform_10(%arg0: i32) -> (i32, i32) {
    %c0_i32 = arith.constant 0 : i32
    %c0_i32_0 = arith.constant 0 : i32
    %c0_i32_1 = arith.constant 0 : i32
    return %c0_i32, %c0_i32_0 : i32, i32
  }
  func.func @transform_11(%arg0: i32) -> (i32, i32) {
    %c0_i32 = arith.constant 0 : i32
    %c0_i32_0 = arith.constant 0 : i32
    return %arg0, %c0_i32 : i32, i32
  }
}

</mosaic_0001>

<llo_original>
// kernel: tpu_custom_call.1
$region0: #{tpu_custom_call.1}
  #allocation0 [shape = 'u32[]', space=smem, size = 0x4, offset = 0x4, fixed_abs, tag = 'smem constant byte address 0x4 - core index']
  #allocation1 [shape = 'u32[144,128]{1,0:T(1,128)}', space=vmem, size = 0x12000, scoped, tag = 'internal scratch']
  %s0 = inlined_call_operand.hbm [shape: f32[4,358], index: 0, kind: input, shape index: {}]
  %s1 = inlined_call_operand.hbm [shape: bf16[358,512], index: 1, kind: input, shape index: {}]
  %s2 = inlined_call_operand.hbm [shape: f32[1,512], index: 2, kind: input, shape index: {}]
  %s3 = inlined_call_operand.hbm [shape: bf16[512,512], index: 3, kind: input, shape index: {}]
  %s4 = inlined_call_operand.vmem [shape: f32[1,512], index: 4, kind: input, shape index: {}]
  %s5 = inlined_call_operand.hbm [shape: bf16[512,256], index: 5, kind: input, shape index: {}]
  %s6 = inlined_call_operand.vmem [shape: f32[1,256], index: 6, kind: input, shape index: {}]
  %s7 = inlined_call_operand.hbm [shape: bf16[256,128], index: 7, kind: input, shape index: {}]
  %s8 = inlined_call_operand.vmem [shape: f32[1,128], index: 8, kind: input, shape index: {}]
  %s9 = inlined_call_operand.hbm [shape: bf16[128,128], index: 9, kind: input, shape index: {}]
  %s10 = inlined_call_operand.vmem [shape: f32[1,128], index: 10, kind: input, shape index: {}]
  %s11 = inlined_call_operand.hbm [shape: f32[4,128], index: 11, kind: output, shape index: {}]
  %s12 = sld [smem:[#allocation0]]
  $region82: #{tpu_custom_call.1} parent=0
    _
  %s14 = ssub.s32 1, %s12
  %s15 = scalar_select 0, %s14, %s12
  $region1: #{tpu_custom_call.1} parent=0
    #allocation2 [shape = 'u8[6144]{0}', space=vmem, size = 0x1800, scoped, tag = 'input window, operand 0, single buffered']
    #allocation3 [shape = 's32[1]{0}', space=sflag, size = 0x4, scoped, tag = 'scoped memory for tpu_custom_call.1']
    #allocation4 [shape = 's32[1]{0}', space=sflag, size = 0x4, scoped, tag = 'scoped memory for tpu_custom_call.1']
    #allocation5 [shape = 'u8[368640]{0}', space=vmem, size = 0x5a000, scoped, tag = 'input window, operand 1, single buffered']
    #allocation6 [shape = 's32[1]{0}', space=sflag, size = 0x4, scoped, tag = 'scoped memory for tpu_custom_call.1']
    #allocation7 [shape = 'u8[2048]{0}', space=vmem, size = 0x800, scoped, tag = 'input window, operand 2, single buffered']
    #allocation8 [shape = 'u8[524288]{0}', space=vmem, size = 0x80000, scoped, tag = 'input window, operand 3, single buffered']
    #allocation9 [shape = 's32[1]{0}', space=sflag, size = 0x4, scoped, tag = 'scoped memory for tpu_custom_call.1']
    #allocation10 [shape = 'u8[262144]{0}', space=vmem, size = 0x40000, scoped, tag = 'input window, operand 5, single buffered']
    #allocation11 [shape = 'u8[65536]{0}', space=vmem, size = 0x10000, scoped, tag = 'input window, operand 7, single buffered']
    #allocation12 [shape = 's32[1]{0}', space=sflag, size = 0x4, scoped, tag = 'scoped memory for tpu_custom_call.1']
    #allocation13 [shape = 'u8[32768]{0}', space=vmem, size = 0x8000, scoped, tag = 'input window, operand 9, single buffered']
    #allocation14 [shape = 'u8[2048]{0}', space=vmem, size = 0x800, scoped, tag = 'output window, operand 0, single buffered']
    %16 = vsyncpa [#allocation3], 0
    %17 = vsyncpa [#allocation6], 0
    %18 = vsyncpa [#allocation9], 0
    %19 = vsyncpa [#allocation12], 0
    %20 = vsyncpa [#allocation4], 0
    // Predicated region
    $region2: #{tpu_custom_call.1} parent=1 // pred_check
      _
    $region3: #{tpu_custom_call.1} parent=1 // pred_check_branch
      %22 = sbr.rel (0) target = $region5
    $region4: #{tpu_custom_call.1} parent=1 // pred_region
      %s24 = ssub.s32 192, 192
      %25 = vsyncadd [#allocation3], %s24
      %s27 = sshll.u32 [#allocation2], 4
      %s28 = int_to_ptr.vmem [resolvable:$true] %s27
      %30 = dma.hbm_to_vmem [thread:$0]  %s0, 192, %s28, [#allocation3]
    $region5: #{tpu_custom_call.1} parent=1 // pred_fallthru
      _
    // Predicated region
    $region6: #{tpu_custom_call.1} parent=1 // pred_check
      _
    $region7: #{tpu_custom_call.1} parent=1 // pred_check_branch
      %32 = sbr.rel (0) target = $region9
    $region8: #{tpu_custom_call.1} parent=1 // pred_region
      %s34 = ssub.s32 11520, 11520
      %35 = vsyncadd [#allocation6], %s34
      %s36 = sshll.u32 [#allocation5], 4
      %s37 = int_to_ptr.vmem [resolvable:$true] %s36
      %42 = dma.hbm_to_vmem [thread:$0]  %s1, 11520, %s37, [#allocation6], 256, 256, 16
    $region9: #{tpu_custom_call.1} parent=1 // pred_fallthru
      _
    // Predicated region
    $region10: #{tpu_custom_call.1} parent=1 // pred_check
      _
    $region11: #{tpu_custom_call.1} parent=1 // pred_check_branch
      %44 = sbr.rel (0) target = $region13
    $region12: #{tpu_custom_call.1} parent=1 // pred_region
      %s46 = ssub.s32 64, 64
      %47 = vsyncadd [#allocation6], %s46
      %s49 = sshll.u32 [#allocation7], 4
      %s50 = int_to_ptr.vmem [resolvable:$true] %s49
      %52 = dma.hbm_to_vmem [thread:$0]  %s2, 64, %s50, [#allocation6]
    $region13: #{tpu_custom_call.1} parent=1 // pred_fallthru
      _
    // Predicated region
    $region14: #{tpu_custom_call.1} parent=1 // pred_check
      _
    $region15: #{tpu_custom_call.1} parent=1 // pred_check_branch
      %54 = sbr.rel (0) target = $region17
    $region16: #{tpu_custom_call.1} parent=1 // pred_region
      %s56 = ssub.s32 16384, 16384
      %57 = vsyncadd [#allocation9], %s56
      %s58 = sshll.u32 [#allocation8], 4
      %s59 = int_to_ptr.vmem [resolvable:$true] %s58
      %64 = dma.hbm_to_vmem [thread:$0]  %s3, 16384, %s59, [#allocation9], 256, 256, 16
    $region17: #{tpu_custom_call.1} parent=1 // pred_fallthru
      _
    // Predicated region
    $region18: #{tpu_custom_call.1} parent=1 // pred_check
      _
    $region19: #{tpu_custom_call.1} parent=1 // pred_check_branch
      %66 = sbr.rel (0) target = $region21
    $region20: #{tpu_custom_call.1} parent=1 // pred_region
      _
    $region21: #{tpu_custom_call.1} parent=1 // pred_fallthru
      _
    // Predicated region
    $region22: #{tpu_custom_call.1} parent=1 // pred_check
      _
    $region23: #{tpu_custom_call.1} parent=1 // pred_check_branch
      %68 = sbr.rel (0) target = $region25
    $region24: #{tpu_custom_call.1} parent=1 // pred_region
      %s70 = ssub.s32 8192, 8192
      %71 = vsyncadd [#allocation9], %s70
      %s72 = sshll.u32 [#allocation10], 4
      %s73 = int_to_ptr.vmem [resolvable:$true] %s72
      %78 = dma.hbm_to_vmem [thread:$0]  %s5, 8192, %s73, [#allocation9], 128, 128, 8
    $region25: #{tpu_custom_call.1} parent=1 // pred_fallthru
      _
    // Predicated region
    $region26: #{tpu_custom_call.1} parent=1 // pred_check
      _
    $region27: #{tpu_custom_call.1} parent=1 // pred_check_branch
      %80 = sbr.rel (0) target = $region29
    $region28: #{tpu_custom_call.1} parent=1 // pred_region
      _
    $region29: #{tpu_custom_call.1} parent=1 // pred_fallthru
      _
    // Predicated region
    $region30: #{tpu_custom_call.1} parent=1 // pred_check
      _
    $region31: #{tpu_custom_call.1} parent=1 // pred_check_branch
      %82 = sbr.rel (0) target = $region33
    $region32: #{tpu_custom_call.1} parent=1 // pred_region
      %s84 = ssub.s32 2048, 2048
      %85 = vsyncadd [#allocation12], %s84
      %s86 = sshll.u32 [#allocation11], 4
      %s87 = int_to_ptr.vmem [resolvable:$true] %s86
      %92 = dma.hbm_to_vmem [thread:$0]  %s7, 2048, %s87, [#allocation12], 64, 64, 4
    $region33: #{tpu_custom_call.1} parent=1 // pred_fallthru
      _
    // Predicated region
    $region34: #{tpu_custom_call.1} parent=1 // pred_check
      _
    $region35: #{tpu_custom_call.1} parent=1 // pred_check_branch
      %94 = sbr.rel (0) target = $region37
    $region36: #{tpu_custom_call.1} parent=1 // pred_region
      _
    $region37: #{tpu_custom_call.1} parent=1 // pred_fallthru
      _
    // Predicated region
    $region38: #{tpu_custom_call.1} parent=1 // pred_check
      _
    $region39: #{tpu_custom_call.1} parent=1 // pred_check_branch
      %96 = sbr.rel (0) target = $region41
    $region40: #{tpu_custom_call.1} parent=1 // pred_region
      %s98 = ssub.s32 1024, 1024
      %99 = vsyncadd [#allocation12], %s98
      %s100 = sshll.u32 [#allocation13], 4
      %s101 = int_to_ptr.vmem [resolvable:$true] %s100
      %106 = dma.hbm_to_vmem [thread:$0]  %s9, 1024, %s101, [#allocation12], 64, 64, 4
    $region41: #{tpu_custom_call.1} parent=1 // pred_fallthru
      _
    // Predicated region
    $region42: #{tpu_custom_call.1} parent=1 // pred_check
      _
    $region43: #{tpu_custom_call.1} parent=1 // pred_check_branch
      %108 = sbr.rel (0) target = $region45
    $region44: #{tpu_custom_call.1} parent=1 // pred_region
      _
    $region45: #{tpu_custom_call.1} parent=1 // pred_fallthru
      _
    // Predicated region
    $region46: #{tpu_custom_call.1} parent=1 // pred_check
      _
    $region47: #{tpu_custom_call.1} parent=1 // pred_check_branch
      %110 = sbr.rel (0) target = $region49
    $region48: #{tpu_custom_call.1} parent=1 // pred_region
      %111 = dma.done [#allocation3], 192
    $region49: #{tpu_custom_call.1} parent=1 // pred_fallthru
      _
    // Predicated region
    $region50: #{tpu_custom_call.1} parent=1 // pred_check
      _
    $region51: #{tpu_custom_call.1} parent=1 // pred_check_branch
      %113 = sbr.rel (0) target = $region53
    $region52: #{tpu_custom_call.1} parent=1 // pred_region
      %114 = dma.done [#allocation6], 11520
    $region53: #{tpu_custom_call.1} parent=1 // pred_fallthru
      _
    // Predicated region
    $region54: #{tpu_custom_call.1} parent=1 // pred_check
      _
    $region55: #{tpu_custom_call.1} parent=1 // pred_check_branch
      %116 = sbr.rel (0) target = $region57
    $region56: #{tpu_custom_call.1} parent=1 // pred_region
      %117 = dma.done [#allocation6], 64
    $region57: #{tpu_custom_call.1} parent=1 // pred_fallthru
      _
    // Predicated region
    $region58: #{tpu_custom_call.1} parent=1 // pred_check
      _
    $region59: #{tpu_custom_call.1} parent=1 // pred_check_branch
      %119 = sbr.rel (0) target = $region61
    $region60: #{tpu_custom_call.1} parent=1 // pred_region
      %120 = dma.done [#allocation9], 16384
    $region61: #{tpu_custom_call.1} parent=1 // pred_fallthru
      _
    // Predicated region
    $region62: #{tpu_custom_call.1} parent=1 // pred_check
      _
    $region63: #{tpu_custom_call.1} parent=1 // pred_check_branch
      %122 = sbr.rel (0) target = $region65
    $region64: #{tpu_custom_call.1} parent=1 // pred_region
      %123 = dma.done [#allocation9], 8192
    $region65: #{tpu_custom_call.1} parent=1 // pred_fallthru
      _
    // Predicated region
    $region66: #{tpu_custom_call.1} parent=1 // pred_check
      _
    $region67: #{tpu_custom_call.1} parent=1 // pred_check_branch
      %125 = sbr.rel (0) target = $region69
    $region68: #{tpu_custom_call.1} parent=1 // pred_region
      %126 = dma.done [#allocation12], 2048
    $region69: #{tpu_custom_call.1} parent=1 // pred_fallthru
      _
    // Predicated region
    $region70: #{tpu_custom_call.1} parent=1 // pred_check
      _
    $region71: #{tpu_custom_call.1} parent=1 // pred_check_branch
      %128 = sbr.rel (0) target = $region73
    $region72: #{tpu_custom_call.1} parent=1 // pred_region
      %129 = dma.done [#allocation12], 1024
    $region73: #{tpu_custom_call.1} parent=1 // pred_fallthru
      _
    %v131 = vld [vmem:[#allocation2] sm:$0xff]
    %v132 = vld [vmem:[#allocation2 + $0x8] sm:$0xf]
    %v134 = vcombine.high %v131, %v131
    %v136 = vpack.c.bf16 %v131, %v131
    %v137 = vpack.c.bf16 %v134, %v134
    %v138 = vpack.c.bf16 %v132, %v132
    %v139 = vld [vmem:[#allocation5] sm:$0xff]
    %v140 = vld [vmem:[#allocation5 + $0x8] sm:$0xff]
    %v141 = vld [vmem:[#allocation5 + $0x10] sm:$0xff]
    %v142 = vld [vmem:[#allocation5 + $0x18] sm:$0xff]
    %v143 = vld [vmem:[#allocation5 + $0x20] sm:$0xff]
    %v144 = vld [vmem:[#allocation5 + $0x28] sm:$0xff]
    %v145 = vld [vmem:[#allocation5 + $0x30] sm:$0xff]
    %v146 = vld [vmem:[#allocation5 + $0x38] sm:$0xff]
    %v147 = vld [vmem:[#allocation5 + $0x40] sm:$0xff]
    %v148 = vld [vmem:[#allocation5 + $0x48] sm:$0xff]
    %v149 = vld [vmem:[#allocation5 + $0x50] sm:$0xff]
    %v150 = vld [vmem:[#allocation5 + $0x58] sm:$0xff]
    %v151 = vld [vmem:[#allocation5 + $0x60] sm:$0xff]
    %v152 = vld [vmem:[#allocation5 + $0x68] sm:$0xff]
    %v153 = vld [vmem:[#allocation5 + $0x70] sm:$0xff]
    %v154 = vld [vmem:[#allocation5 + $0x78] sm:$0xff]
    %v155 = vld [vmem:[#allocation5 + $0x80] sm:$0xff]
    %v156 = vld [vmem:[#allocation5 + $0x88] sm:$0xff]
    %v157 = vld [vmem:[#allocation5 + $0x90] sm:$0xff]
    %v158 = vld [vmem:[#allocation5 + $0x98] sm:$0xff]
    %v159 = vld [vmem:[#allocation5 + $0xa0] sm:$0xff]
    %v160 = vld [vmem:[#allocation5 + $0xa8] sm:$0xff]
    %v161 = vld [vmem:[#allocation5 + $0xb0] sm:$0xff]
    %v162 = vld [vmem:[#allocation5 + $0xb8] sm:$0xff]
    %v163 = vld [vmem:[#allocation5 + $0xc0] sm:$0xff]
    %v164 = vld [vmem:[#allocation5 + $0xc8] sm:$0xff]
    %v165 = vld [vmem:[#allocation5 + $0xd0] sm:$0xff]
    %v166 = vld [vmem:[#allocation5 + $0xd8] sm:$0xff]
    %v167 = vld [vmem:[#allocation5 + $0xe0] sm:$0xff]
    %v168 = vld [vmem:[#allocation5 + $0xe8] sm:$0xff]
    %v169 = vld [vmem:[#allocation5 + $0xf0] sm:$0xff]
    %v170 = vld [vmem:[#allocation5 + $0xf8] sm:$0xff]
    %v171 = vld [vmem:[#allocation5 + $0x100] sm:$0xff]
    %v172 = vld [vmem:[#allocation5 + $0x108] sm:$0xff]
    %v173 = vld [vmem:[#allocation5 + $0x110] sm:$0xff]
    %v174 = vld [vmem:[#allocation5 + $0x118] sm:$0xff]
    %v175 = vld [vmem:[#allocation5 + $0x120] sm:$0xff]
    %v176 = vld [vmem:[#allocation5 + $0x128] sm:$0xff]
    %v177 = vld [vmem:[#allocation5 + $0x130] sm:$0xff]
    %v178 = vld [vmem:[#allocation5 + $0x138] sm:$0xff]
    %v179 = vld [vmem:[#allocation5 + $0x140] sm:$0xff]
    %v180 = vld [vmem:[#allocation5 + $0x148] sm:$0xff]
    %v181 = vld [vmem:[#allocation5 + $0x150] sm:$0xff]
    %v182 = vld [vmem:[#allocation5 + $0x158] sm:$0xff]
    %v183 = vld [vmem:[#allocation5 + $0x160] sm:$0xff]
    %v184 = vld [vmem:[#allocation5 + $0x168] sm:$0xff]
    %v185 = vld [vmem:[#allocation5 + $0x170] sm:$0xff]
    %v186 = vld [vmem:[#allocation5 + $0x178] sm:$0xff]
    %v187 = vld [vmem:[#allocation5 + $0x180] sm:$0xff]
    %v188 = vld [vmem:[#allocation5 + $0x188] sm:$0xff]
    %v189 = vld [vmem:[#allocation5 + $0x190] sm:$0xff]
    %v190 = vld [vmem:[#allocation5 + $0x198] sm:$0xff]
    %v191 = vld [vmem:[#allocation5 + $0x1a0] sm:$0xff]
    %v192 = vld [vmem:[#allocation5 + $0x1a8] sm:$0xff]
    %v193 = vld [vmem:[#allocation5 + $0x1b0] sm:$0xff]
    %v194 = vld [vmem:[#allocation5 + $0x1b8] sm:$0xff]
    %v195 = vld [vmem:[#allocation5 + $0x1c0] sm:$0xff]
    %v196 = vld [vmem:[#allocation5 + $0x1c8] sm:$0xff]
    %v197 = vld [vmem:[#allocation5 + $0x1d0] sm:$0xff]
    %v198 = vld [vmem:[#allocation5 + $0x1d8] sm:$0xff]
    %v199 = vld [vmem:[#allocation5 + $0x1e0] sm:$0xff]
    %v200 = vld [vmem:[#allocation5 + $0x1e8] sm:$0xff]
    %v201 = vld [vmem:[#allocation5 + $0x1f0] sm:$0xff]
    %v202 = vld [vmem:[#allocation5 + $0x1f8] sm:$0xff]
    %v203 = vld [vmem:[#allocation5 + $0x200] sm:$0xff]
    %v204 = vld [vmem:[#allocation5 + $0x208] sm:$0xff]
    %v205 = vld [vmem:[#allocation5 + $0x210] sm:$0xff]
    %v206 = vld [vmem:[#allocation5 + $0x218] sm:$0xff]
    %v207 = vld [vmem:[#allocation5 + $0x220] sm:$0xff]
    %v208 = vld [vmem:[#allocation5 + $0x228] sm:$0xff]
    %v209 = vld [vmem:[#allocation5 + $0x230] sm:$0xff]
    %v210 = vld [vmem:[#allocation5 + $0x238] sm:$0xff]
    %v211 = vld [vmem:[#allocation5 + $0x240] sm:$0xff]
    %v212 = vld [vmem:[#allocation5 + $0x248] sm:$0xff]
    %v213 = vld [vmem:[#allocation5 + $0x250] sm:$0xff]
    %v214 = vld [vmem:[#allocation5 + $0x258] sm:$0xff]
    %v215 = vld [vmem:[#allocation5 + $0x260] sm:$0xff]
    %v216 = vld [vmem:[#allocation5 + $0x268] sm:$0xff]
    %v217 = vld [vmem:[#allocation5 + $0x270] sm:$0xff]
    %v218 = vld [vmem:[#allocation5 + $0x278] sm:$0xff]
    %v219 = vld [vmem:[#allocation5 + $0x280] sm:$0xff]
    %v220 = vld [vmem:[#allocation5 + $0x288] sm:$0xff]
    %v221 = vld [vmem:[#allocation5 + $0x290] sm:$0xff]
    %v222 = vld [vmem:[#allocation5 + $0x298] sm:$0xff]
    %v223 = vld [vmem:[#allocation5 + $0x2a0] sm:$0xff]
    %v224 = vld [vmem:[#allocation5 + $0x2a8] sm:$0xff]
    %v225 = vld [vmem:[#allocation5 + $0x2b0] sm:$0xff]
    %v226 = vld [vmem:[#allocation5 + $0x2b8] sm:$0xff]
    %v227 = vld [vmem:[#allocation5 + $0x2c0] sm:$0x77]
    %v228 = vld [vmem:[#allocation5 + $0x2c8] sm:$0x77]
    %v229 = vld [vmem:[#allocation7] sm:$0xf]
    %v231 = vlaneseq
    %v232 = vshrl.u32 %v231, 7
    %v233 = vsub.s32 0, %v232
    %v234 = vrot.slane %v229, %v233
    %v235 = vlaneseq
    %v236 = vshrl.u32 %v235, 7
    %v237 = vsub.s32 1, %v236
    %v238 = vrot.slane %v229, %v237
    %v239 = vlaneseq
    %v240 = vshrl.u32 %v239, 7
    %v241 = vsub.s32 2, %v240
    %v242 = vrot.slane %v229, %v241
    %v243 = vlaneseq
    %v244 = vshrl.u32 %v243, 7
    %v245 = vsub.s32 3, %v244
    %v246 = vrot.slane %v229, %v245
    %v341 = vunpack.c.l.b16 %v139
    %v342 = vunpack.c.h.b16 %v139
    %v343 = vunpack.c.l.b16 %v140
    %v344 = vunpack.c.h.b16 %v140
    %v345 = vunpack.c.l.b16 %v141
    %v346 = vunpack.c.h.b16 %v141
    %v347 = vunpack.c.l.b16 %v142
    %v348 = vunpack.c.h.b16 %v142
    %v349 = vunpack.c.l.b16 %v143
    %v350 = vunpack.c.h.b16 %v143
    %v351 = vunpack.c.l.b16 %v144
    %v352 = vunpack.c.h.b16 %v144
    %v353 = vunpack.c.l.b16 %v145
    %v354 = vunpack.c.h.b16 %v145
    %v355 = vunpack.c.l.b16 %v146
    %v356 = vunpack.c.h.b16 %v146
    %v357 = vunpack.c.l.b16 %v147
    %v358 = vunpack.c.h.b16 %v147
    %v359 = vunpack.c.l.b16 %v148
    %v360 = vunpack.c.h.b16 %v148
    %v361 = vunpack.c.l.b16 %v149
    %v362 = vunpack.c.h.b16 %v149
    %v363 = vunpack.c.l.b16 %v150
    %v364 = vunpack.c.h.b16 %v150
    %v365 = vunpack.c.l.b16 %v151
    %v366 = vunpack.c.h.b16 %v151
    %v367 = vunpack.c.l.b16 %v152
    %v368 = vunpack.c.h.b16 %v152
    %v369 = vunpack.c.l.b16 %v153
    %v370 = vunpack.c.h.b16 %v153
    %v371 = vunpack.c.l.b16 %v154
    %v372 = vunpack.c.h.b16 %v154
    %v373 = vunpack.c.l.b16 %v155
    %v374 = vunpack.c.h.b16 %v155
    %v375 = vunpack.c.l.b16 %v156
    %v376 = vunpack.c.h.b16 %v156
    %v377 = vunpack.c.l.b16 %v157
    %v378 = vunpack.c.h.b16 %v157
    %v379 = vunpack.c.l.b16 %v158
    %v380 = vunpack.c.h.b16 %v158
    %v381 = vunpack.c.l.b16 %v159
    %v382 = vunpack.c.h.b16 %v159
    %v383 = vunpack.c.l.b16 %v160
    %v384 = vunpack.c.h.b16 %v160
    %v385 = vunpack.c.l.b16 %v161
    %v386 = vunpack.c.h.b16 %v161
    %v387 = vunpack.c.l.b16 %v162
    %v388 = vunpack.c.h.b16 %v162
    %v389 = vunpack.c.l.b16 %v163
    %v390 = vunpack.c.h.b16 %v163
    %v391 = vunpack.c.l.b16 %v164
    %v392 = vunpack.c.h.b16 %v164
    %v393 = vunpack.c.l.b16 %v165
    %v394 = vunpack.c.h.b16 %v165
    %v395 = vunpack.c.l.b16 %v166
    %v396 = vunpack.c.h.b16 %v166
    %v397 = vunpack.c.l.b16 %v167
    %v398 = vunpack.c.h.b16 %v167
    %v399 = vunpack.c.l.b16 %v168
    %v400 = vunpack.c.h.b16 %v168
    %v401 = vunpack.c.l.b16 %v169
    %v402 = vunpack.c.h.b16 %v169
    %v403 = vunpack.c.l.b16 %v170
    %v404 = vunpack.c.h.b16 %v170
    %v405 = vunpack.c.l.b16 %v171
    %v406 = vunpack.c.h.b16 %v171
    %v407 = vunpack.c.l.b16 %v172
    %v408 = vunpack.c.h.b16 %v172
    %v409 = vunpack.c.l.b16 %v173
    %v410 = vunpack.c.h.b16 %v173
    %v411 = vunpack.c.l.b16 %v174
    %v412 = vunpack.c.h.b16 %v174
    %v413 = vunpack.c.l.b16 %v175
    %v414 = vunpack.c.h.b16 %v175
    %v415 = vunpack.c.l.b16 %v176
    %v416 = vunpack.c.h.b16 %v176
    %v417 = vunpack.c.l.b16 %v177
    %v418 = vunpack.c.h.b16 %v177
    %v419 = vunpack.c.l.b16 %v178
    %v420 = vunpack.c.h.b16 %v178
    %v421 = vunpack.c.l.b16 %v179
    %v422 = vunpack.c.h.b16 %v179
    %v423 = vunpack.c.l.b16 %v180
    %v424 = vunpack.c.h.b16 %v180
    %v425 = vunpack.c.l.b16 %v181
    %v426 = vunpack.c.h.b16 %v181
    %v427 = vunpack.c.l.b16 %v182
    %v428 = vunpack.c.h.b16 %v182
    %v429 = vunpack.c.l.b16 %v183
    %v430 = vunpack.c.h.b16 %v183
    %v431 = vunpack.c.l.b16 %v184
    %v432 = vunpack.c.h.b16 %v184
    %v433 = vunpack.c.l.b16 %v185
    %v434 = vunpack.c.h.b16 %v185
    %v435 = vunpack.c.l.b16 %v186
    %v436 = vunpack.c.h.b16 %v186
    %v437 = vunpack.c.l.b16 %v187
    %v438 = vunpack.c.h.b16 %v187
    %v439 = vunpack.c.l.b16 %v188
    %v440 = vunpack.c.h.b16 %v188
    %v441 = vunpack.c.l.b16 %v189
    %v442 = vunpack.c.h.b16 %v189
    %v443 = vunpack.c.l.b16 %v190
    %v444 = vunpack.c.h.b16 %v190
    %v445 = vunpack.c.l.b16 %v191
    %v446 = vunpack.c.h.b16 %v191
    %v447 = vunpack.c.l.b16 %v192
    %v448 = vunpack.c.h.b16 %v192
    %v449 = vunpack.c.l.b16 %v193
    %v450 = vunpack.c.h.b16 %v193
    %v451 = vunpack.c.l.b16 %v194
    %v452 = vunpack.c.h.b16 %v194
    %v453 = vunpack.c.l.b16 %v195
    %v454 = vunpack.c.h.b16 %v195
    %v455 = vunpack.c.l.b16 %v196
    %v456 = vunpack.c.h.b16 %v196
    %v457 = vunpack.c.l.b16 %v197
    %v458 = vunpack.c.h.b16 %v197
    %v459 = vunpack.c.l.b16 %v198
    %v460 = vunpack.c.h.b16 %v198
    %v461 = vunpack.c.l.b16 %v199
    %v462 = vunpack.c.h.b16 %v199
    %v463 = vunpack.c.l.b16 %v200
    %v464 = vunpack.c.h.b16 %v200
    %v465 = vunpack.c.l.b16 %v201
    %v466 = vunpack.c.h.b16 %v201
    %v467 = vunpack.c.l.b16 %v202
    %v468 = vunpack.c.h.b16 %v202
    %v469 = vunpack.c.l.b16 %v203
    %v470 = vunpack.c.h.b16 %v203
    %v471 = vunpack.c.l.b16 %v204
    %v472 = vunpack.c.h.b16 %v204
    %v473 = vunpack.c.l.b16 %v205
    %v474 = vunpack.c.h.b16 %v205
    %v475 = vunpack.c.l.b16 %v206
    %v476 = vunpack.c.h.b16 %v206
    %v477 = vunpack.c.l.b16 %v207
    %v478 = vunpack.c.h.b16 %v207
    %v479 = vunpack.c.l.b16 %v208
    %v480 = vunpack.c.h.b16 %v208
    %v481 = vunpack.c.l.b16 %v209
    %v482 = vunpack.c.h.b16 %v209
    %v483 = vunpack.c.l.b16 %v210
    %v484 = vunpack.c.h.b16 %v210
    %v485 = vunpack.c.l.b16 %v211
    %v486 = vunpack.c.h.b16 %v211
    %v487 = vunpack.c.l.b16 %v212
    %v488 = vunpack.c.h.b16 %v212
    %v489 = vunpack.c.l.b16 %v213
    %v490 = vunpack.c.h.b16 %v213
    %v491 = vunpack.c.l.b16 %v214
    %v492 = vunpack.c.h.b16 %v214
    %v493 = vunpack.c.l.b16 %v215
    %v494 = vunpack.c.h.b16 %v215
    %v495 = vunpack.c.l.b16 %v216
    %v496 = vunpack.c.h.b16 %v216
    %v497 = vunpack.c.l.b16 %v217
    %v498 = vunpack.c.h.b16 %v217
    %v499 = vunpack.c.l.b16 %v218
    %v500 = vunpack.c.h.b16 %v218
    %v501 = vunpack.c.l.b16 %v219
    %v502 = vunpack.c.h.b16 %v219
    %v503 = vunpack.c.l.b16 %v220
    %v504 = vunpack.c.h.b16 %v220
    %v505 = vunpack.c.l.b16 %v221
    %v506 = vunpack.c.h.b16 %v221
    %v507 = vunpack.c.l.b16 %v222
    %v508 = vunpack.c.h.b16 %v222
    %v509 = vunpack.c.l.b16 %v223
    %v510 = vunpack.c.h.b16 %v223
    %v511 = vunpack.c.l.b16 %v224
    %v512 = vunpack.c.h.b16 %v224
    %v513 = vunpack.c.l.b16 %v225
    %v514 = vunpack.c.h.b16 %v225
    %v515 = vunpack.c.l.b16 %v226
    %v516 = vunpack.c.h.b16 %v226
    %v517 = vunpack.c.l.b16 %v227
    %v518 = vunpack.c.h.b16 %v227
    %v519 = vunpack.c.l.b16 %v228
    %v520 = vunpack.c.h.b16 %v228
    %v521 = vpack.c.b16 %v345, %v341
    %v522 = vpack.c.b16 %v346, %v342
    %v523 = vpack.c.b16 %v347, %v343
    %v524 = vpack.c.b16 %v348, %v344
    %v525 = vpack.c.b16 %v353, %v349
    %v526 = vpack.c.b16 %v354, %v350
    %v527 = vpack.c.b16 %v355, %v351
    %v528 = vpack.c.b16 %v356, %v352
    %v529 = vpack.c.b16 %v361, %v357
    %v530 = vpack.c.b16 %v362, %v358
    %v531 = vpack.c.b16 %v363, %v359
    %v532 = vpack.c.b16 %v364, %v360
    %v533 = vpack.c.b16 %v369, %v365
    %v534 = vpack.c.b16 %v370, %v366
    %v535 = vpack.c.b16 %v371, %v367
    %v536 = vpack.c.b16 %v372, %v368
    %v537 = vpack.c.b16 %v377, %v373
    %v538 = vpack.c.b16 %v378, %v374
    %v539 = vpack.c.b16 %v379, %v375
    %v540 = vpack.c.b16 %v380, %v376
    %v541 = vpack.c.b16 %v385, %v381
    %v542 = vpack.c.b16 %v386, %v382
    %v543 = vpack.c.b16 %v387, %v383
    %v544 = vpack.c.b16 %v388, %v384
    %v545 = vpack.c.b16 %v393, %v389
    %v546 = vpack.c.b16 %v394, %v390
    %v547 = vpack.c.b16 %v395, %v391
    %v548 = vpack.c.b16 %v396, %v392
    %v549 = vpack.c.b16 %v401, %v397
    %v550 = vpack.c.b16 %v402, %v398
    %v551 = vpack.c.b16 %v403, %v399
    %v552 = vpack.c.b16 %v404, %v400
    %v553 = vpack.c.b16 %v409, %v405
    %v554 = vpack.c.b16 %v410, %v406
    %v555 = vpack.c.b16 %v411, %v407
    %v556 = vpack.c.b16 %v412, %v408
    %v557 = vpack.c.b16 %v417, %v413
    %v558 = vpack.c.b16 %v418, %v414
    %v559 = vpack.c.b16 %v419, %v415
    %v560 = vpack.c.b16 %v420, %v416
    %v561 = vpack.c.b16 %v425, %v421
    %v562 = vpack.c.b16 %v426, %v422
    %v563 = vpack.c.b16 %v427, %v423
    %v564 = vpack.c.b16 %v428, %v424
    %v565 = vpack.c.b16 %v433, %v429
    %v566 = vpack.c.b16 %v434, %v430
    %v567 = vpack.c.b16 %v435, %v431
    %v568 = vpack.c.b16 %v436, %v432
    %v569 = vpack.c.b16 %v441, %v437
    %v570 = vpack.c.b16 %v442, %v438
    %v571 = vpack.c.b16 %v443, %v439
    %v572 = vpack.c.b16 %v444, %v440
    %v573 = vpack.c.b16 %v449, %v445
    %v574 = vpack.c.b16 %v450, %v446
    %v575 = vpack.c.b16 %v451, %v447
    %v576 = vpack.c.b16 %v452, %v448
    %v577 = vpack.c.b16 %v457, %v453
    %v578 = vpack.c.b16 %v458, %v454
    %v579 = vpack.c.b16 %v459, %v455
    %v580 = vpack.c.b16 %v460, %v456
    %v581 = vpack.c.b16 %v465, %v461
    %v582 = vpack.c.b16 %v466, %v462
    %v583 = vpack.c.b16 %v467, %v463
    %v584 = vpack.c.b16 %v468, %v464
    %v585 = vpack.c.b16 %v473, %v469
    %v586 = vpack.c.b16 %v474, %v470
    %v587 = vpack.c.b16 %v475, %v471
    %v588 = vpack.c.b16 %v476, %v472
    %v589 = vpack.c.b16 %v481, %v477
    %v590 = vpack.c.b16 %v482, %v478
    %v591 = vpack.c.b16 %v483, %v479
    %v592 = vpack.c.b16 %v484, %v480
    %v593 = vpack.c.b16 %v489, %v485
    %v594 = vpack.c.b16 %v490, %v486
    %v595 = vpack.c.b16 %v491, %v487
    %v596 = vpack.c.b16 %v492, %v488
    %v597 = vpack.c.b16 %v497, %v493
    %v598 = vpack.c.b16 %v498, %v494
    %v599 = vpack.c.b16 %v499, %v495
    %v600 = vpack.c.b16 %v500, %v496
    %v601 = vpack.c.b16 %v505, %v501
    %v602 = vpack.c.b16 %v506, %v502
    %v603 = vpack.c.b16 %v507, %v503
    %v604 = vpack.c.b16 %v508, %v504
    %v605 = vpack.c.b16 %v513, %v509
    %v606 = vpack.c.b16 %v514, %v510
    %v607 = vpack.c.b16 %v515, %v511
    %v608 = vpack.c.b16 %v516, %v512
    %v609 = vpack.c.b16 %v517, %v517
    %v610 = vpack.c.b16 %v518, %v518
    %v611 = vpack.c.b16 %v519, %v519
    %v612 = vpack.c.b16 %v520, %v520
    %vm701 = vcmask 834560
    %v703 = vsel %vm701, %v138, 0
    %vm705 = vcmask 1042432
    %v707 = vsel %vm705, %v609, 0
    %v710 = vsel %vm705, %v610, 0
    %v713 = vsel %vm705, %v611, 0
    %v716 = vsel %vm705, %v612, 0
    %718 = vmatprep.subr.bf16.mxu0 %v550
    %719 = vmatpush1.bf16.msra.mxu0 %v549
    %720 = vmatprep.subr.bf16.mxu0 %v546
    %721 = vmatpush1.bf16.msra.mxu0 %v545
    %722 = vmatprep.subr.bf16.mxu0 %v542
    %723 = vmatpush1.bf16.msra.mxu0 %v541
    %724 = vmatprep.subr.bf16.mxu0 %v538
    %725 = vmatpush1.bf16.msra.mxu0 %v537
    %726 = vmatprep.subr.bf16.mxu0 %v534
    %727 = vmatpush1.bf16.msra.mxu0 %v533
    %728 = vmatprep.subr.bf16.mxu0 %v530
    %729 = vmatpush1.bf16.msra.mxu0 %v529
    %730 = vmatprep.subr.bf16.mxu0 %v526
    %731 = vmatpush1.bf16.msra.mxu0 %v525
    %732 = vmatprep.subr.bf16.mxu0 %v522
    %733 = vmatpush1.bf16.msra.mxu0 %v521
    %734 = vmatprep.subr.bf16.mxu0 %v582
    %735 = vmatpush2.bf16.msra.mxu0 %v581
    %736 = vmatprep.subr.bf16.mxu0 %v578
    %737 = vmatpush2.bf16.msra.mxu0 %v577
    %738 = vmatprep.subr.bf16.mxu0 %v574
    %739 = vmatpush2.bf16.msra.mxu0 %v573
    %740 = vmatprep.subr.bf16.mxu0 %v570
    %741 = vmatpush2.bf16.msra.mxu0 %v569
    %742 = vmatprep.subr.bf16.mxu0 %v566
    %743 = vmatpush2.bf16.msra.mxu0 %v565
    %744 = vmatprep.subr.bf16.mxu0 %v562
    %745 = vmatpush2.bf16.msra.mxu0 %v561
    %746 = vmatprep.subr.bf16.mxu0 %v558
    %747 = vmatpush2.bf16.msra.mxu0 %v557
    %748 = vmatprep.subr.bf16.mxu0 %v554
    %749 = vmatpush2.bf16.msra.mxu0 %v553
    %750 = vmatprep.mubr.bf16.mxu0 %v137
    %751 = vmatmul.mubr.bf16.gmra.mxu0 %v136
    %v752 = vpop.f32.mrf.mxu0
    %v753 = vadd.f32 %v234, %v752
    %v754 = vpop.f32.mrf.mxu0
    %v755 = vadd.f32 %v238, %v754
    %v756 = vpop.f32.mrf.mxu0
    %v757 = vpop.f32.mrf.mxu0
    %758 = vdwg.mxu0
    %759 = vmatprep.subr.bf16.mxu0 0
    %760 = vmatpush1.bf16.msra.mxu0 0
    %761 = vmatprep.subr.bf16.mxu0 %v710
    %762 = vmatpush1.bf16.msra.mxu0 %v707
    %763 = vmatprep.subr.bf16.mxu0 %v606
    %764 = vmatpush1.bf16.msra.mxu0 %v605
    %765 = vmatprep.subr.bf16.mxu0 %v602
    %766 = vmatpush1.bf16.msra.mxu0 %v601
    %767 = vmatprep.subr.bf16.mxu0 %v598
    %768 = vmatpush1.bf16.msra.mxu0 %v597
    %769 = vmatprep.subr.bf16.mxu0 %v594
    %770 = vmatpush1.bf16.msra.mxu0 %v593
    %771 = vmatprep.subr.bf16.mxu0 %v590
    %772 = vmatpush1.bf16.msra.mxu0 %v589
    %773 = vmatprep.subr.bf16.mxu0 %v586
    %774 = vmatpush1.bf16.msra.mxu0 %v585
    %775 = vmatprep.subr.bf16.mxu0 0
    %776 = vmatpush2.bf16.msra.mxu0 0
    %777 = vmatprep.subr.bf16.mxu0 0
    %778 = vmatpush2.bf16.msra.mxu0 0
    %779 = vmatprep.subr.bf16.mxu0 0
    %780 = vmatpush2.bf16.msra.mxu0 0
    %781 = vmatprep.subr.bf16.mxu0 0
    %782 = vmatpush2.bf16.msra.mxu0 0
    %783 = vmatprep.subr.bf16.mxu0 0
    %784 = vmatpush2.bf16.msra.mxu0 0
    %785 = vmatprep.subr.bf16.mxu0 0
    %786 = vmatpush2.bf16.msra.mxu0 0
    %787 = vmatprep.subr.bf16.mxu0 0
    %788 = vmatpush2.bf16.msra.mxu0 0
    %789 = vmatprep.subr.bf16.mxu0 0
    %790 = vmatpush2.bf16.msra.mxu0 0
    %791 = vmatprep.mubr.bf16.mxu0 0
    %792 = vmatmul.mubr.bf16.gmra.mxu0 %v703
    %v793 = vpop.f32.mrf.mxu0
    %v794 = vadd.f32 %v753, %v793
    %v795 = vpop.f32.mrf.mxu0
    %v796 = vadd.f32 %v755, %v795
    %v797 = vpop.f32.mrf.mxu0
    %v798 = vpop.f32.mrf.mxu0
    %799 = vdwg.mxu0
    %800 = vmatprep.subr.bf16.mxu0 %v552
    %801 = vmatpush1.bf16.msra.mxu0 %v551
    %802 = vmatprep.subr.bf16.mxu0 %v548
    %803 = vmatpush1.bf16.msra.mxu0 %v547
    %804 = vmatprep.subr.bf16.mxu0 %v544
    %805 = vmatpush1.bf16.msra.mxu0 %v543
    %806 = vmatprep.subr.bf16.mxu0 %v540
    %807 = vmatpush1.bf16.msra.mxu0 %v539
    %808 = vmatprep.subr.bf16.mxu0 %v536
    %809 = vmatpush1.bf16.msra.mxu0 %v535
    %810 = vmatprep.subr.bf16.mxu0 %v532
    %811 = vmatpush1.bf16.msra.mxu0 %v531
    %812 = vmatprep.subr.bf16.mxu0 %v528
    %813 = vmatpush1.bf16.msra.mxu0 %v527
    %814 = vmatprep.subr.bf16.mxu0 %v524
    %815 = vmatpush1.bf16.msra.mxu0 %v523
    %816 = vmatprep.subr.bf16.mxu0 %v584
    %817 = vmatpush2.bf16.msra.mxu0 %v583
    %818 = vmatprep.subr.bf16.mxu0 %v580
    %819 = vmatpush2.bf16.msra.mxu0 %v579
    %820 = vmatprep.subr.bf16.mxu0 %v576
    %821 = vmatpush2.bf16.msra.mxu0 %v575
    %822 = vmatprep.subr.bf16.mxu0 %v572
    %823 = vmatpush2.bf16.msra.mxu0 %v571
    %824 = vmatprep.subr.bf16.mxu0 %v568
    %825 = vmatpush2.bf16.msra.mxu0 %v567
    %826 = vmatprep.subr.bf16.mxu0 %v564
    %827 = vmatpush2.bf16.msra.mxu0 %v563
    %828 = vmatprep.subr.bf16.mxu0 %v560
    %829 = vmatpush2.bf16.msra.mxu0 %v559
    %830 = vmatprep.subr.bf16.mxu0 %v556
    %831 = vmatpush2.bf16.msra.mxu0 %v555
    %832 = vmatprep.mubr.bf16.mxu0 %v137
    %833 = vmatmul.mubr.bf16.gmra.mxu0 %v136
    %v834 = vpop.f32.mrf.mxu0
    %v835 = vadd.f32 %v242, %v834
    %v836 = vpop.f32.mrf.mxu0
    %v837 = vadd.f32 %v246, %v836
    %v838 = vpop.f32.mrf.mxu0
    %v839 = vpop.f32.mrf.mxu0
    %840 = vdwg.mxu0
    %841 = vmatprep.subr.bf16.mxu0 0
    %842 = vmatpush1.bf16.msra.mxu0 0
    %843 = vmatprep.subr.bf16.mxu0 %v716
    %844 = vmatpush1.bf16.msra.mxu0 %v713
    %845 = vmatprep.subr.bf16.mxu0 %v608
    %846 = vmatpush1.bf16.msra.mxu0 %v607
    %847 = vmatprep.subr.bf16.mxu0 %v604
    %848 = vmatpush1.bf16.msra.mxu0 %v603
    %849 = vmatprep.subr.bf16.mxu0 %v600
    %850 = vmatpush1.bf16.msra.mxu0 %v599
    %851 = vmatprep.subr.bf16.mxu0 %v596
    %852 = vmatpush1.bf16.msra.mxu0 %v595
    %853 = vmatprep.subr.bf16.mxu0 %v592
    %854 = vmatpush1.bf16.msra.mxu0 %v591
    %855 = vmatprep.subr.bf16.mxu0 %v588
    %856 = vmatpush1.bf16.msra.mxu0 %v587
    %857 = vmatprep.subr.bf16.mxu0 0
    %858 = vmatpush2.bf16.msra.mxu0 0
    %859 = vmatprep.subr.bf16.mxu0 0
    %860 = vmatpush2.bf16.msra.mxu0 0
    %861 = vmatprep.subr.bf16.mxu0 0
    %862 = vmatpush2.bf16.msra.mxu0 0
    %863 = vmatprep.subr.bf16.mxu0 0
    %864 = vmatpush2.bf16.msra.mxu0 0
    %865 = vmatprep.subr.bf16.mxu0 0
    %866 = vmatpush2.bf16.msra.mxu0 0
    %867 = vmatprep.subr.bf16.mxu0 0
    %868 = vmatpush2.bf16.msra.mxu0 0
    %869 = vmatprep.subr.bf16.mxu0 0
    %870 = vmatpush2.bf16.msra.mxu0 0
    %871 = vmatprep.subr.bf16.mxu0 0
    %872 = vmatpush2.bf16.msra.mxu0 0
    %873 = vmatprep.mubr.bf16.mxu0 0
    %874 = vmatmul.mubr.bf16.gmra.mxu0 %v703
    %v875 = vpop.f32.mrf.mxu0
    %v876 = vadd.f32 %v835, %v875
    %v877 = vpop.f32.mrf.mxu0
    %v878 = vadd.f32 %v837, %v877
    %v879 = vpop.f32.mrf.mxu0
    %v880 = vpop.f32.mrf.mxu0
    %881 = vdwg.mxu0
    %v882 = vmax.f32 %v794, 0.0
    %v883 = vmax.f32 %v796, 0.0
    %v884 = vmax.f32 %v876, 0.0
    %v885 = vmax.f32 %v878, 0.0
    %v886 = vpack.c.bf16 %v882, %v882
    %v887 = vpack.c.bf16 %v883, %v883
    %v888 = vpack.c.bf16 %v884, %v884
    %v889 = vpack.c.bf16 %v885, %v885
    %v890 = vld [vmem:[#allocation8] sm:$0xff]
    %v891 = vld [vmem:[#allocation8 + $0x8] sm:$0xff]
    %v892 = vld [vmem:[#allocation8 + $0x10] sm:$0xff]
    %v893 = vld [vmem:[#allocation8 + $0x18] sm:$0xff]
    %v894 = vld [vmem:[#allocation8 + $0x20] sm:$0xff]
    %v895 = vld [vmem:[#allocation8 + $0x28] sm:$0xff]
    %v896 = vld [vmem:[#allocation8 + $0x30] sm:$0xff]
    %v897 = vld [vmem:[#allocation8 + $0x38] sm:$0xff]
    %v898 = vld [vmem:[#allocation8 + $0x40] sm:$0xff]
    %v899 = vld [vmem:[#allocation8 + $0x48] sm:$0xff]
    %v900 = vld [vmem:[#allocation8 + $0x50] sm:$0xff]
    %v901 = vld [vmem:[#allocation8 + $0x58] sm:$0xff]
    %v902 = vld [vmem:[#allocation8 + $0x60] sm:$0xff]
    %v903 = vld [vmem:[#allocation8 + $0x68] sm:$0xff]
    %v904 = vld [vmem:[#allocation8 + $0x70] sm:$0xff]
    %v905 = vld [vmem:[#allocation8 + $0x78] sm:$0xff]
    %v906 = vld [vmem:[#allocation8 + $0x80] sm:$0xff]
    %v907 = vld [vmem:[#allocation8 + $0x88] sm:$0xff]
    %v908 = vld [vmem:[#allocation8 + $0x90] sm:$0xff]
    %v909 = vld [vmem:[#allocation8 + $0x98] sm:$0xff]
    %v910 = vld [vmem:[#allocation8 + $0xa0] sm:$0xff]
    %v911 = vld [vmem:[#allocation8 + $0xa8] sm:$0xff]
    %v912 = vld [vmem:[#allocation8 + $0xb0] sm:$0xff]
    %v913 = vld [vmem:[#allocation8 + $0xb8] sm:$0xff]
    %v914 = vld [vmem:[#allocation8 + $0xc0] sm:$0xff]
    %v915 = vld [vmem:[#allocation8 + $0xc8] sm:$0xff]
    %v916 = vld [vmem:[#allocation8 + $0xd0] sm:$0xff]
    %v917 = vld [vmem:[#allocation8 + $0xd8] sm:$0xff]
    %v918 = vld [vmem:[#allocation8 + $0xe0] sm:$0xff]
    %v919 = vld [vmem:[#allocation8 + $0xe8] sm:$0xff]
    %v920 = vld [vmem:[#allocation8 + $0xf0] sm:$0xff]
    %v921 = vld [vmem:[#allocation8 + $0xf8] sm:$0xff]
    %v922 = vld [vmem:[#allocation8 + $0x100] sm:$0xff]
    %v923 = vld [vmem:[#allocation8 + $0x108] sm:$0xff]
    %v924 = vld [vmem:[#allocation8 + $0x110] sm:$0xff]
    %v925 = vld [vmem:[#allocation8 + $0x118] sm:$0xff]
    %v926 = vld [vmem:[#allocation8 + $0x120] sm:$0xff]
    %v927 = vld [vmem:[#allocation8 + $0x128] sm:$0xff]
    %v928 = vld [vmem:[#allocation8 + $0x130] sm:$0xff]
    %v929 = vld [vmem:[#allocation8 + $0x138] sm:$0xff]
    %v930 = vld [vmem:[#allocation8 + $0x140] sm:$0xff]
    %v931 = vld [vmem:[#allocation8 + $0x148] sm:$0xff]
    %v932 = vld [vmem:[#allocation8 + $0x150] sm:$0xff]
    %v933 = vld [vmem:[#allocation8 + $0x158] sm:$0xff]
    %v934 = vld [vmem:[#allocation8 + $0x160] sm:$0xff]
    %v935 = vld [vmem:[#allocation8 + $0x168] sm:$0xff]
    %v936 = vld [vmem:[#allocation8 + $0x170] sm:$0xff]
    %v937 = vld [vmem:[#allocation8 + $0x178] sm:$0xff]
    %v938 = vld [vmem:[#allocation8 + $0x180] sm:$0xff]
    %v939 = vld [vmem:[#allocation8 + $0x188] sm:$0xff]
    %v940 = vld [vmem:[#allocation8 + $0x190] sm:$0xff]
    %v941 = vld [vmem:[#allocation8 + $0x198] sm:$0xff]
    %v942 = vld [vmem:[#allocation8 + $0x1a0] sm:$0xff]
    %v943 = vld [vmem:[#allocation8 + $0x1a8] sm:$0xff]
    %v944 = vld [vmem:[#allocation8 + $0x1b0] sm:$0xff]
    %v945 = vld [vmem:[#allocation8 + $0x1b8] sm:$0xff]
    %v946 = vld [vmem:[#allocation8 + $0x1c0] sm:$0xff]
    %v947 = vld [vmem:[#allocation8 + $0x1c8] sm:$0xff]
    %v948 = vld [vmem:[#allocation8 + $0x1d0] sm:$0xff]
    %v949 = vld [vmem:[#allocation8 + $0x1d8] sm:$0xff]
    %v950 = vld [vmem:[#allocation8 + $0x1e0] sm:$0xff]
    %v951 = vld [vmem:[#allocation8 + $0x1e8] sm:$0xff]
    %v952 = vld [vmem:[#allocation8 + $0x1f0] sm:$0xff]
    %v953 = vld [vmem:[#allocation8 + $0x1f8] sm:$0xff]
    %v954 = vld [vmem:[#allocation8 + $0x200] sm:$0xff]
    %v955 = vld [vmem:[#allocation8 + $0x208] sm:$0xff]
    %v956 = vld [vmem:[#allocation8 + $0x210] sm:$0xff]
    %v957 = vld [vmem:[#allocation8 + $0x218] sm:$0xff]
    %v958 = vld [vmem:[#allocation8 + $0x220] sm:$0xff]
    %v959 = vld [vmem:[#allocation8 + $0x228] sm:$0xff]
    %v960 = vld [vmem:[#allocation8 + $0x230] sm:$0xff]
    %v961 = vld [vmem:[#allocation8 + $0x238] sm:$0xff]
    %v962 = vld [vmem:[#allocation8 + $0x240] sm:$0xff]
    %v963 = vld [vmem:[#allocation8 + $0x248] sm:$0xff]
    %v964 = vld [vmem:[#allocation8 + $0x250] sm:$0xff]
    %v965 = vld [vmem:[#allocation8 + $0x258] sm:$0xff]
    %v966 = vld [vmem:[#allocation8 + $0x260] sm:$0xff]
    %v967 = vld [vmem:[#allocation8 + $0x268] sm:$0xff]
    %v968 = vld [vmem:[#allocation8 + $0x270] sm:$0xff]
    %v969 = vld [vmem:[#allocation8 + $0x278] sm:$0xff]
    %v970 = vld [vmem:[#allocation8 + $0x280] sm:$0xff]
    %v971 = vld [vmem:[#allocation8 + $0x288] sm:$0xff]
    %v972 = vld [vmem:[#allocation8 + $0x290] sm:$0xff]
    %v973 = vld [vmem:[#allocation8 + $0x298] sm:$0xff]
    %v974 = vld [vmem:[#allocation8 + $0x2a0] sm:$0xff]
    %v975 = vld [vmem:[#allocation8 + $0x2a8] sm:$0xff]
    %v976 = vld [vmem:[#allocation8 + $0x2b0] sm:$0xff]
    %v977 = vld [vmem:[#allocation8 + $0x2b8] sm:$0xff]
    %v978 = vld [vmem:[#allocation8 + $0x2c0] sm:$0xff]
    %v979 = vld [vmem:[#allocation8 + $0x2c8] sm:$0xff]
    %v980 = vld [vmem:[#allocation8 + $0x2d0] sm:$0xff]
    %v981 = vld [vmem:[#allocation8 + $0x2d8] sm:$0xff]
    %v982 = vld [vmem:[#allocation8 + $0x2e0] sm:$0xff]
    %v983 = vld [vmem:[#allocation8 + $0x2e8] sm:$0xff]
    %v984 = vld [vmem:[#allocation8 + $0x2f0] sm:$0xff]
    %v985 = vld [vmem:[#allocation8 + $0x2f8] sm:$0xff]
    %v986 = vld [vmem:[#allocation8 + $0x300] sm:$0xff]
    %v987 = vld [vmem:[#allocation8 + $0x308] sm:$0xff]
    %v988 = vld [vmem:[#allocation8 + $0x310] sm:$0xff]
    %v989 = vld [vmem:[#allocation8 + $0x318] sm:$0xff]
    %v990 = vld [vmem:[#allocation8 + $0x320] sm:$0xff]
    %v991 = vld [vmem:[#allocation8 + $0x328] sm:$0xff]
    %v992 = vld [vmem:[#allocation8 + $0x330] sm:$0xff]
    %v993 = vld [vmem:[#allocation8 + $0x338] sm:$0xff]
    %v994 = vld [vmem:[#allocation8 + $0x340] sm:$0xff]
    %v995 = vld [vmem:[#allocation8 + $0x348] sm:$0xff]
    %v996 = vld [vmem:[#allocation8 + $0x350] sm:$0xff]
    %v997 = vld [vmem:[#allocation8 + $0x358] sm:$0xff]
    %v998 = vld [vmem:[#allocation8 + $0x360] sm:$0xff]
    %v999 = vld [vmem:[#allocation8 + $0x368] sm:$0xff]
    %v1000 = vld [vmem:[#allocation8 + $0x370] sm:$0xff]
    %v1001 = vld [vmem:[#allocation8 + $0x378] sm:$0xff]
    %v1002 = vld [vmem:[#allocation8 + $0x380] sm:$0xff]
    %v1003 = vld [vmem:[#allocation8 + $0x388] sm:$0xff]
    %v1004 = vld [vmem:[#allocation8 + $0x390] sm:$0xff]
    %v1005 = vld [vmem:[#allocation8 + $0x398] sm:$0xff]
    %v1006 = vld [vmem:[#allocation8 + $0x3a0] sm:$0xff]
    %v1007 = vld [vmem:[#allocation8 + $0x3a8] sm:$0xff]
    %v1008 = vld [vmem:[#allocation8 + $0x3b0] sm:$0xff]
    %v1009 = vld [vmem:[#allocation8 + $0x3b8] sm:$0xff]
    %v1010 = vld [vmem:[#allocation8 + $0x3c0] sm:$0xff]
    %v1011 = vld [vmem:[#allocation8 + $0x3c8] sm:$0xff]
    %v1012 = vld [vmem:[#allocation8 + $0x3d0] sm:$0xff]
    %v1013 = vld [vmem:[#allocation8 + $0x3d8] sm:$0xff]
    %v1014 = vld [vmem:[#allocation8 + $0x3e0] sm:$0xff]
    %v1015 = vld [vmem:[#allocation8 + $0x3e8] sm:$0xff]
    %v1016 = vld [vmem:[#allocation8 + $0x3f0] sm:$0xff]
    %v1017 = vld [vmem:[#allocation8 + $0x3f8] sm:$0xff]
    %v1018 = vld [vmem:[%s4] sm:$0xf]
    %v1020 = vlaneseq
    %v1021 = vshrl.u32 %v1020, 7
    %v1022 = vsub.s32 0, %v1021
    %v1023 = vrot.slane %v1018, %v1022
    %v1024 = vlaneseq
    %v1025 = vshrl.u32 %v1024, 7
    %v1026 = vsub.s32 1, %v1025
    %v1027 = vrot.slane %v1018, %v1026
    %v1028 = vlaneseq
    %v1029 = vshrl.u32 %v1028, 7
    %v1030 = vsub.s32 2, %v1029
    %v1031 = vrot.slane %v1018, %v1030
    %v1032 = vlaneseq
    %v1033 = vshrl.u32 %v1032, 7
    %v1034 = vsub.s32 3, %v1033
    %v1035 = vrot.slane %v1018, %v1034
    %v1168 = vunpack.c.l.b16 %v890
    %v1169 = vunpack.c.h.b16 %v890
    %v1170 = vunpack.c.l.b16 %v891
    %v1171 = vunpack.c.h.b16 %v891
    %v1172 = vunpack.c.l.b16 %v892
    %v1173 = vunpack.c.h.b16 %v892
    %v1174 = vunpack.c.l.b16 %v893
    %v1175 = vunpack.c.h.b16 %v893
    %v1176 = vunpack.c.l.b16 %v894
    %v1177 = vunpack.c.h.b16 %v894
    %v1178 = vunpack.c.l.b16 %v895
    %v1179 = vunpack.c.h.b16 %v895
    %v1180 = vunpack.c.l.b16 %v896
    %v1181 = vunpack.c.h.b16 %v896
    %v1182 = vunpack.c.l.b16 %v897
    %v1183 = vunpack.c.h.b16 %v897
    %v1184 = vunpack.c.l.b16 %v898
    %v1185 = vunpack.c.h.b16 %v898
    %v1186 = vunpack.c.l.b16 %v899
    %v1187 = vunpack.c.h.b16 %v899
    %v1188 = vunpack.c.l.b16 %v900
    %v1189 = vunpack.c.h.b16 %v900
    %v1190 = vunpack.c.l.b16 %v901
    %v1191 = vunpack.c.h.b16 %v901
    %v1192 = vunpack.c.l.b16 %v902
    %v1193 = vunpack.c.h.b16 %v902
    %v1194 = vunpack.c.l.b16 %v903
    %v1195 = vunpack.c.h.b16 %v903
    %v1196 = vunpack.c.l.b16 %v904
    %v1197 = vunpack.c.h.b16 %v904
    %v1198 = vunpack.c.l.b16 %v905
    %v1199 = vunpack.c.h.b16 %v905
    %v1200 = vunpack.c.l.b16 %v906
    %v1201 = vunpack.c.h.b16 %v906
    %v1202 = vunpack.c.l.b16 %v907
    %v1203 = vunpack.c.h.b16 %v907
    %v1204 = vunpack.c.l.b16 %v908
    %v1205 = vunpack.c.h.b16 %v908
    %v1206 = vunpack.c.l.b16 %v909
    %v1207 = vunpack.c.h.b16 %v909
    %v1208 = vunpack.c.l.b16 %v910
    %v1209 = vunpack.c.h.b16 %v910
    %v1210 = vunpack.c.l.b16 %v911
    %v1211 = vunpack.c.h.b16 %v911
    %v1212 = vunpack.c.l.b16 %v912
    %v1213 = vunpack.c.h.b16 %v912
    %v1214 = vunpack.c.l.b16 %v913
    %v1215 = vunpack.c.h.b16 %v913
    %v1216 = vunpack.c.l.b16 %v914
    %v1217 = vunpack.c.h.b16 %v914
    %v1218 = vunpack.c.l.b16 %v915
    %v1219 = vunpack.c.h.b16 %v915
    %v1220 = vunpack.c.l.b16 %v916
    %v1221 = vunpack.c.h.b16 %v916
    %v1222 = vunpack.c.l.b16 %v917
    %v1223 = vunpack.c.h.b16 %v917
    %v1224 = vunpack.c.l.b16 %v918
    %v1225 = vunpack.c.h.b16 %v918
    %v1226 = vunpack.c.l.b16 %v919
    %v1227 = vunpack.c.h.b16 %v919
    %v1228 = vunpack.c.l.b16 %v920
    %v1229 = vunpack.c.h.b16 %v920
    %v1230 = vunpack.c.l.b16 %v921
    %v1231 = vunpack.c.h.b16 %v921
    %v1232 = vunpack.c.l.b16 %v922
    %v1233 = vunpack.c.h.b16 %v922
    %v1234 = vunpack.c.l.b16 %v923
    %v1235 = vunpack.c.h.b16 %v923
    %v1236 = vunpack.c.l.b16 %v924
    %v1237 = vunpack.c.h.b16 %v924
    %v1238 = vunpack.c.l.b16 %v925
    %v1239 = vunpack.c.h.b16 %v925
    %v1240 = vunpack.c.l.b16 %v926
    %v1241 = vunpack.c.h.b16 %v926
    %v1242 = vunpack.c.l.b16 %v927
    %v1243 = vunpack.c.h.b16 %v927
    %v1244 = vunpack.c.l.b16 %v928
    %v1245 = vunpack.c.h.b16 %v928
    %v1246 = vunpack.c.l.b16 %v929
    %v1247 = vunpack.c.h.b16 %v929
    %v1248 = vunpack.c.l.b16 %v930
    %v1249 = vunpack.c.h.b16 %v930
    %v1250 = vunpack.c.l.b16 %v931
    %v1251 = vunpack.c.h.b16 %v931
    %v1252 = vunpack.c.l.b16 %v932
    %v1253 = vunpack.c.h.b16 %v932
    %v1254 = vunpack.c.l.b16 %v933
    %v1255 = vunpack.c.h.b16 %v933
    %v1256 = vunpack.c.l.b16 %v934
    %v1257 = vunpack.c.h.b16 %v934
    %v1258 = vunpack.c.l.b16 %v935
    %v1259 = vunpack.c.h.b16 %v935
    %v1260 = vunpack.c.l.b16 %v936
    %v1261 = vunpack.c.h.b16 %v936
    %v1262 = vunpack.c.l.b16 %v937
    %v1263 = vunpack.c.h.b16 %v937
    %v1264 = vunpack.c.l.b16 %v938
    %v1265 = vunpack.c.h.b16 %v938
    %v1266 = vunpack.c.l.b16 %v939
    %v1267 = vunpack.c.h.b16 %v939
    %v1268 = vunpack.c.l.b16 %v940
    %v1269 = vunpack.c.h.b16 %v940
    %v1270 = vunpack.c.l.b16 %v941
    %v1271 = vunpack.c.h.b16 %v941
    %v1272 = vunpack.c.l.b16 %v942
    %v1273 = vunpack.c.h.b16 %v942
    %v1274 = vunpack.c.l.b16 %v943
    %v1275 = vunpack.c.h.b16 %v943
    %v1276 = vunpack.c.l.b16 %v944
    %v1277 = vunpack.c.h.b16 %v944
    %v1278 = vunpack.c.l.b16 %v945
    %v1279 = vunpack.c.h.b16 %v945
    %v1280 = vunpack.c.l.b16 %v946
    %v1281 = vunpack.c.h.b16 %v946
    %v1282 = vunpack.c.l.b16 %v947
    %v1283 = vunpack.c.h.b16 %v947
    %v1284 = vunpack.c.l.b16 %v948
    %v1285 = vunpack.c.h.b16 %v948
    %v1286 = vunpack.c.l.b16 %v949
    %v1287 = vunpack.c.h.b16 %v949
    %v1288 = vunpack.c.l.b16 %v950
    %v1289 = vunpack.c.h.b16 %v950
    %v1290 = vunpack.c.l.b16 %v951
    %v1291 = vunpack.c.h.b16 %v951
    %v1292 = vunpack.c.l.b16 %v952
    %v1293 = vunpack.c.h.b16 %v952
    %v1294 = vunpack.c.l.b16 %v953
    %v1295 = vunpack.c.h.b16 %v953
    %v1296 = vunpack.c.l.b16 %v954
    %v1297 = vunpack.c.h.b16 %v954
    %v1298 = vunpack.c.l.b16 %v955
    %v1299 = vunpack.c.h.b16 %v955
    %v1300 = vunpack.c.l.b16 %v956
    %v1301 = vunpack.c.h.b16 %v956
    %v1302 = vunpack.c.l.b16 %v957
    %v1303 = vunpack.c.h.b16 %v957
    %v1304 = vunpack.c.l.b16 %v958
    %v1305 = vunpack.c.h.b16 %v958
    %v1306 = vunpack.c.l.b16 %v959
    %v1307 = vunpack.c.h.b16 %v959
    %v1308 = vunpack.c.l.b16 %v960
    %v1309 = vunpack.c.h.b16 %v960
    %v1310 = vunpack.c.l.b16 %v961
    %v1311 = vunpack.c.h.b16 %v961
    %v1312 = vunpack.c.l.b16 %v962
    %v1313 = vunpack.c.h.b16 %v962
    %v1314 = vunpack.c.l.b16 %v963
    %v1315 = vunpack.c.h.b16 %v963
    %v1316 = vunpack.c.l.b16 %v964
    %v1317 = vunpack.c.h.b16 %v964
    %v1318 = vunpack.c.l.b16 %v965
    %v1319 = vunpack.c.h.b16 %v965
    %v1320 = vunpack.c.l.b16 %v966
    %v1321 = vunpack.c.h.b16 %v966
    %v1322 = vunpack.c.l.b16 %v967
    %v1323 = vunpack.c.h.b16 %v967
    %v1324 = vunpack.c.l.b16 %v968
    %v1325 = vunpack.c.h.b16 %v968
    %v1326 = vunpack.c.l.b16 %v969
    %v1327 = vunpack.c.h.b16 %v969
    %v1328 = vunpack.c.l.b16 %v970
    %v1329 = vunpack.c.h.b16 %v970
    %v1330 = vunpack.c.l.b16 %v971
    %v1331 = vunpack.c.h.b16 %v971
    %v1332 = vunpack.c.l.b16 %v972
    %v1333 = vunpack.c.h.b16 %v972
    %v1334 = vunpack.c.l.b16 %v973
    %v1335 = vunpack.c.h.b16 %v973
    %v1336 = vunpack.c.l.b16 %v974
    %v1337 = vunpack.c.h.b16 %v974
    %v1338 = vunpack.c.l.b16 %v975
    %v1339 = vunpack.c.h.b16 %v975
    %v1340 = vunpack.c.l.b16 %v976
    %v1341 = vunpack.c.h.b16 %v976
    %v1342 = vunpack.c.l.b16 %v977
    %v1343 = vunpack.c.h.b16 %v977
    %v1344 = vunpack.c.l.b16 %v978
    %v1345 = vunpack.c.h.b16 %v978
    %v1346 = vunpack.c.l.b16 %v979
    %v1347 = vunpack.c.h.b16 %v979
    %v1348 = vunpack.c.l.b16 %v980
    %v1349 = vunpack.c.h.b16 %v980
    %v1350 = vunpack.c.l.b16 %v981
    %v1351 = vunpack.c.h.b16 %v981
    %v1352 = vunpack.c.l.b16 %v982
    %v1353 = vunpack.c.h.b16 %v982
    %v1354 = vunpack.c.l.b16 %v983
    %v1355 = vunpack.c.h.b16 %v983
    %v1356 = vunpack.c.l.b16 %v984
    %v1357 = vunpack.c.h.b16 %v984
    %v1358 = vunpack.c.l.b16 %v985
    %v1359 = vunpack.c.h.b16 %v985
    %v1360 = vunpack.c.l.b16 %v986
    %v1361 = vunpack.c.h.b16 %v986
    %v1362 = vunpack.c.l.b16 %v987
    %v1363 = vunpack.c.h.b16 %v987
    %v1364 = vunpack.c.l.b16 %v988
    %v1365 = vunpack.c.h.b16 %v988
    %v1366 = vunpack.c.l.b16 %v989
    %v1367 = vunpack.c.h.b16 %v989
    %v1368 = vunpack.c.l.b16 %v990
    %v1369 = vunpack.c.h.b16 %v990
    %v1370 = vunpack.c.l.b16 %v991
    %v1371 = vunpack.c.h.b16 %v991
    %v1372 = vunpack.c.l.b16 %v992
    %v1373 = vunpack.c.h.b16 %v992
    %v1374 = vunpack.c.l.b16 %v993
    %v1375 = vunpack.c.h.b16 %v993
    %v1376 = vunpack.c.l.b16 %v994
    %v1377 = vunpack.c.h.b16 %v994
    %v1378 = vunpack.c.l.b16 %v995
    %v1379 = vunpack.c.h.b16 %v995
    %v1380 = vunpack.c.l.b16 %v996
    %v1381 = vunpack.c.h.b16 %v996
    %v1382 = vunpack.c.l.b16 %v997
    %v1383 = vunpack.c.h.b16 %v997
    %v1384 = vunpack.c.l.b16 %v998
    %v1385 = vunpack.c.h.b16 %v998
    %v1386 = vunpack.c.l.b16 %v999
    %v1387 = vunpack.c.h.b16 %v999
    %v1388 = vunpack.c.l.b16 %v1000
    %v1389 = vunpack.c.h.b16 %v1000
    %v1390 = vunpack.c.l.b16 %v1001
    %v1391 = vunpack.c.h.b16 %v1001
    %v1392 = vunpack.c.l.b16 %v1002
    %v1393 = vunpack.c.h.b16 %v1002
    %v1394 = vunpack.c.l.b16 %v1003
    %v1395 = vunpack.c.h.b16 %v1003
    %v1396 = vunpack.c.l.b16 %v1004
    %v1397 = vunpack.c.h.b16 %v1004
    %v1398 = vunpack.c.l.b16 %v1005
    %v1399 = vunpack.c.h.b16 %v1005
    %v1400 = vunpack.c.l.b16 %v1006
    %v1401 = vunpack.c.h.b16 %v1006
    %v1402 = vunpack.c.l.b16 %v1007
    %v1403 = vunpack.c.h.b16 %v1007
    %v1404 = vunpack.c.l.b16 %v1008
    %v1405 = vunpack.c.h.b16 %v1008
    %v1406 = vunpack.c.l.b16 %v1009
    %v1407 = vunpack.c.h.b16 %v1009
    %v1408 = vunpack.c.l.b16 %v1010
    %v1409 = vunpack.c.h.b16 %v1010
    %v1410 = vunpack.c.l.b16 %v1011
    %v1411 = vunpack.c.h.b16 %v1011
    %v1412 = vunpack.c.l.b16 %v1012
    %v1413 = vunpack.c.h.b16 %v1012
    %v1414 = vunpack.c.l.b16 %v1013
    %v1415 = vunpack.c.h.b16 %v1013
    %v1416 = vunpack.c.l.b16 %v1014
    %v1417 = vunpack.c.h.b16 %v1014
    %v1418 = vunpack.c.l.b16 %v1015
    %v1419 = vunpack.c.h.b16 %v1015
    %v1420 = vunpack.c.l.b16 %v1016
    %v1421 = vunpack.c.h.b16 %v1016
    %v1422 = vunpack.c.l.b16 %v1017
    %v1423 = vunpack.c.h.b16 %v1017
    %v1424 = vpack.c.b16 %v1172, %v1168
    %v1425 = vpack.c.b16 %v1173, %v1169
    %v1426 = vpack.c.b16 %v1174, %v1170
    %v1427 = vpack.c.b16 %v1175, %v1171
    %v1428 = vpack.c.b16 %v1180, %v1176
    %v1429 = vpack.c.b16 %v1181, %v1177
    %v1430 = vpack.c.b16 %v1182, %v1178
    %v1431 = vpack.c.b16 %v1183, %v1179
    %v1432 = vpack.c.b16 %v1188, %v1184
    %v1433 = vpack.c.b16 %v1189, %v1185
    %v1434 = vpack.c.b16 %v1190, %v1186
    %v1435 = vpack.c.b16 %v1191, %v1187
    %v1436 = vpack.c.b16 %v1196, %v1192
    %v1437 = vpack.c.b16 %v1197, %v1193
    %v1438 = vpack.c.b16 %v1198, %v1194
    %v1439 = vpack.c.b16 %v1199, %v1195
    %v1440 = vpack.c.b16 %v1204, %v1200
    %v1441 = vpack.c.b16 %v1205, %v1201
    %v1442 = vpack.c.b16 %v1206, %v1202
    %v1443 = vpack.c.b16 %v1207, %v1203
    %v1444 = vpack.c.b16 %v1212, %v1208
    %v1445 = vpack.c.b16 %v1213, %v1209
    %v1446 = vpack.c.b16 %v1214, %v1210
    %v1447 = vpack.c.b16 %v1215, %v1211
    %v1448 = vpack.c.b16 %v1220, %v1216
    %v1449 = vpack.c.b16 %v1221, %v1217
    %v1450 = vpack.c.b16 %v1222, %v1218
    %v1451 = vpack.c.b16 %v1223, %v1219
    %v1452 = vpack.c.b16 %v1228, %v1224
    %v1453 = vpack.c.b16 %v1229, %v1225
    %v1454 = vpack.c.b16 %v1230, %v1226
    %v1455 = vpack.c.b16 %v1231, %v1227
    %v1456 = vpack.c.b16 %v1236, %v1232
    %v1457 = vpack.c.b16 %v1237, %v1233
    %v1458 = vpack.c.b16 %v1238, %v1234
    %v1459 = vpack.c.b16 %v1239, %v1235
    %v1460 = vpack.c.b16 %v1244, %v1240
    %v1461 = vpack.c.b16 %v1245, %v1241
    %v1462 = vpack.c.b16 %v1246, %v1242
    %v1463 = vpack.c.b16 %v1247, %v1243
    %v1464 = vpack.c.b16 %v1252, %v1248
    %v1465 = vpack.c.b16 %v1253, %v1249
    %v1466 = vpack.c.b16 %v1254, %v1250
    %v1467 = vpack.c.b16 %v1255, %v1251
    %v1468 = vpack.c.b16 %v1260, %v1256
    %v1469 = vpack.c.b16 %v1261, %v1257
    %v1470 = vpack.c.b16 %v1262, %v1258
    %v1471 = vpack.c.b16 %v1263, %v1259
    %v1472 = vpack.c.b16 %v1268, %v1264
    %v1473 = vpack.c.b16 %v1269, %v1265
    %v1474 = vpack.c.b16 %v1270, %v1266
    %v1475 = vpack.c.b16 %v1271, %v1267
    %v1476 = vpack.c.b16 %v1276, %v1272
    %v1477 = vpack.c.b16 %v1277, %v1273
    %v1478 = vpack.c.b16 %v1278, %v1274
    %v1479 = vpack.c.b16 %v1279, %v1275
    %v1480 = vpack.c.b16 %v1284, %v1280
    %v1481 = vpack.c.b16 %v1285, %v1281
    %v1482 = vpack.c.b16 %v1286, %v1282
    %v1483 = vpack.c.b16 %v1287, %v1283
    %v1484 = vpack.c.b16 %v1292, %v1288
    %v1485 = vpack.c.b16 %v1293, %v1289
    %v1486 = vpack.c.b16 %v1294, %v1290
    %v1487 = vpack.c.b16 %v1295, %v1291
    %v1488 = vpack.c.b16 %v1300, %v1296
    %v1489 = vpack.c.b16 %v1301, %v1297
    %v1490 = vpack.c.b16 %v1302, %v1298
    %v1491 = vpack.c.b16 %v1303, %v1299
    %v1492 = vpack.c.b16 %v1308, %v1304
    %v1493 = vpack.c.b16 %v1309, %v1305
    %v1494 = vpack.c.b16 %v1310, %v1306
    %v1495 = vpack.c.b16 %v1311, %v1307
    %v1496 = vpack.c.b16 %v1316, %v1312
    %v1497 = vpack.c.b16 %v1317, %v1313
    %v1498 = vpack.c.b16 %v1318, %v1314
    %v1499 = vpack.c.b16 %v1319, %v1315
    %v1500 = vpack.c.b16 %v1324, %v1320
    %v1501 = vpack.c.b16 %v1325, %v1321
    %v1502 = vpack.c.b16 %v1326, %v1322
    %v1503 = vpack.c.b16 %v1327, %v1323
    %v1504 = vpack.c.b16 %v1332, %v1328
    %v1505 = vpack.c.b16 %v1333, %v1329
    %v1506 = vpack.c.b16 %v1334, %v1330
    %v1507 = vpack.c.b16 %v1335, %v1331
    %v1508 = vpack.c.b16 %v1340, %v1336
    %v1509 = vpack.c.b16 %v1341, %v1337
    %v1510 = vpack.c.b16 %v1342, %v1338
    %v1511 = vpack.c.b16 %v1343, %v1339
    %v1512 = vpack.c.b16 %v1348, %v1344
    %v1513 = vpack.c.b16 %v1349, %v1345
    %v1514 = vpack.c.b16 %v1350, %v1346
    %v1515 = vpack.c.b16 %v1351, %v1347
    %v1516 = vpack.c.b16 %v1356, %v1352
    %v1517 = vpack.c.b16 %v1357, %v1353
    %v1518 = vpack.c.b16 %v1358, %v1354
    %v1519 = vpack.c.b16 %v1359, %v1355
    %v1520 = vpack.c.b16 %v1364, %v1360
    %v1521 = vpack.c.b16 %v1365, %v1361
    %v1522 = vpack.c.b16 %v1366, %v1362
    %v1523 = vpack.c.b16 %v1367, %v1363
    %v1524 = vpack.c.b16 %v1372, %v1368
    %v1525 = vpack.c.b16 %v1373, %v1369
    %v1526 = vpack.c.b16 %v1374, %v1370
    %v1527 = vpack.c.b16 %v1375, %v1371
    %v1528 = vpack.c.b16 %v1380, %v1376
    %v1529 = vpack.c.b16 %v1381, %v1377
    %v1530 = vpack.c.b16 %v1382, %v1378
    %v1531 = vpack.c.b16 %v1383, %v1379
    %v1532 = vpack.c.b16 %v1388, %v1384
    %v1533 = vpack.c.b16 %v1389, %v1385
    %v1534 = vpack.c.b16 %v1390, %v1386
    %v1535 = vpack.c.b16 %v1391, %v1387
    %v1536 = vpack.c.b16 %v1396, %v1392
    %v1537 = vpack.c.b16 %v1397, %v1393
    %v1538 = vpack.c.b16 %v1398, %v1394
    %v1539 = vpack.c.b16 %v1399, %v1395
    %v1540 = vpack.c.b16 %v1404, %v1400
    %v1541 = vpack.c.b16 %v1405, %v1401
    %v1542 = vpack.c.b16 %v1406, %v1402
    %v1543 = vpack.c.b16 %v1407, %v1403
    %v1544 = vpack.c.b16 %v1412, %v1408
    %v1545 = vpack.c.b16 %v1413, %v1409
    %v1546 = vpack.c.b16 %v1414, %v1410
    %v1547 = vpack.c.b16 %v1415, %v1411
    %v1548 = vpack.c.b16 %v1420, %v1416
    %v1549 = vpack.c.b16 %v1421, %v1417
    %v1550 = vpack.c.b16 %v1422, %v1418
    %v1551 = vpack.c.b16 %v1423, %v1419
    %1680 = vmatprep.subr.bf16.mxu0 %v1453
    %1681 = vmatpush1.bf16.msra.mxu0 %v1452
    %1682 = vmatprep.subr.bf16.mxu0 %v1449
    %1683 = vmatpush1.bf16.msra.mxu0 %v1448
    %1684 = vmatprep.subr.bf16.mxu0 %v1445
    %1685 = vmatpush1.bf16.msra.mxu0 %v1444
    %1686 = vmatprep.subr.bf16.mxu0 %v1441
    %1687 = vmatpush1.bf16.msra.mxu0 %v1440
    %1688 = vmatprep.subr.bf16.mxu0 %v1437
    %1689 = vmatpush1.bf16.msra.mxu0 %v1436
    %1690 = vmatprep.subr.bf16.mxu0 %v1433
    %1691 = vmatpush1.bf16.msra.mxu0 %v1432
    %1692 = vmatprep.subr.bf16.mxu0 %v1429
    %1693 = vmatpush1.bf16.msra.mxu0 %v1428
    %1694 = vmatprep.subr.bf16.mxu0 %v1425
    %1695 = vmatpush1.bf16.msra.mxu0 %v1424
    %1696 = vmatprep.subr.bf16.mxu0 %v1485
    %1697 = vmatpush2.bf16.msra.mxu0 %v1484
    %1698 = vmatprep.subr.bf16.mxu0 %v1481
    %1699 = vmatpush2.bf16.msra.mxu0 %v1480
    %1700 = vmatprep.subr.bf16.mxu0 %v1477
    %1701 = vmatpush2.bf16.msra.mxu0 %v1476
    %1702 = vmatprep.subr.bf16.mxu0 %v1473
    %1703 = vmatpush2.bf16.msra.mxu0 %v1472
    %1704 = vmatprep.subr.bf16.mxu0 %v1469
    %1705 = vmatpush2.bf16.msra.mxu0 %v1468
    %1706 = vmatprep.subr.bf16.mxu0 %v1465
    %1707 = vmatpush2.bf16.msra.mxu0 %v1464
    %1708 = vmatprep.subr.bf16.mxu0 %v1461
    %1709 = vmatpush2.bf16.msra.mxu0 %v1460
    %1710 = vmatprep.subr.bf16.mxu0 %v1457
    %1711 = vmatpush2.bf16.msra.mxu0 %v1456
    %1712 = vmatprep.mubr.bf16.mxu0 %v887
    %1713 = vmatmul.mubr.bf16.gmra.mxu0 %v886
    %v1714 = vpop.f32.mrf.mxu0
    %v1715 = vadd.f32 %v1023, %v1714
    %v1716 = vpop.f32.mrf.mxu0
    %v1717 = vadd.f32 %v1027, %v1716
    %v1718 = vpop.f32.mrf.mxu0
    %v1719 = vpop.f32.mrf.mxu0
    %1720 = vdwg.mxu0
    %1721 = vmatprep.subr.bf16.mxu0 %v1517
    %1722 = vmatpush1.bf16.msra.mxu0 %v1516
    %1723 = vmatprep.subr.bf16.mxu0 %v1513
    %1724 = vmatpush1.bf16.msra.mxu0 %v1512
    %1725 = vmatprep.subr.bf16.mxu0 %v1509
    %1726 = vmatpush1.bf16.msra.mxu0 %v1508
    %1727 = vmatprep.subr.bf16.mxu0 %v1505
    %1728 = vmatpush1.bf16.msra.mxu0 %v1504
    %1729 = vmatprep.subr.bf16.mxu0 %v1501
    %1730 = vmatpush1.bf16.msra.mxu0 %v1500
    %1731 = vmatprep.subr.bf16.mxu0 %v1497
    %1732 = vmatpush1.bf16.msra.mxu0 %v1496
    %1733 = vmatprep.subr.bf16.mxu0 %v1493
    %1734 = vmatpush1.bf16.msra.mxu0 %v1492
    %1735 = vmatprep.subr.bf16.mxu0 %v1489
    %1736 = vmatpush1.bf16.msra.mxu0 %v1488
    %1737 = vmatprep.subr.bf16.mxu0 %v1549
    %1738 = vmatpush2.bf16.msra.mxu0 %v1548
    %1739 = vmatprep.subr.bf16.mxu0 %v1545
    %1740 = vmatpush2.bf16.msra.mxu0 %v1544
    %1741 = vmatprep.subr.bf16.mxu0 %v1541
    %1742 = vmatpush2.bf16.msra.mxu0 %v1540
    %1743 = vmatprep.subr.bf16.mxu0 %v1537
    %1744 = vmatpush2.bf16.msra.mxu0 %v1536
    %1745 = vmatprep.subr.bf16.mxu0 %v1533
    %1746 = vmatpush2.bf16.msra.mxu0 %v1532
    %1747 = vmatprep.subr.bf16.mxu0 %v1529
    %1748 = vmatpush2.bf16.msra.mxu0 %v1528
    %1749 = vmatprep.subr.bf16.mxu0 %v1525
    %1750 = vmatpush2.bf16.msra.mxu0 %v1524
    %1751 = vmatprep.subr.bf16.mxu0 %v1521
    %1752 = vmatpush2.bf16.msra.mxu0 %v1520
    %1753 = vmatprep.mubr.bf16.mxu0 %v889
    %1754 = vmatmul.mubr.bf16.gmra.mxu0 %v888
    %v1755 = vpop.f32.mrf.mxu0
    %v1756 = vadd.f32 %v1715, %v1755
    %v1757 = vpop.f32.mrf.mxu0
    %v1758 = vadd.f32 %v1717, %v1757
    %v1759 = vpop.f32.mrf.mxu0
    %v1760 = vpop.f32.mrf.mxu0
    %1761 = vdwg.mxu0
    %1762 = vmatprep.subr.bf16.mxu0 %v1455
    %1763 = vmatpush1.bf16.msra.mxu0 %v1454
    %1764 = vmatprep.subr.bf16.mxu0 %v1451
    %1765 = vmatpush1.bf16.msra.mxu0 %v1450
    %1766 = vmatprep.subr.bf16.mxu0 %v1447
    %1767 = vmatpush1.bf16.msra.mxu0 %v1446
    %1768 = vmatprep.subr.bf16.mxu0 %v1443
    %1769 = vmatpush1.bf16.msra.mxu0 %v1442
    %1770 = vmatprep.subr.bf16.mxu0 %v1439
    %1771 = vmatpush1.bf16.msra.mxu0 %v1438
    %1772 = vmatprep.subr.bf16.mxu0 %v1435
    %1773 = vmatpush1.bf16.msra.mxu0 %v1434
    %1774 = vmatprep.subr.bf16.mxu0 %v1431
    %1775 = vmatpush1.bf16.msra.mxu0 %v1430
    %1776 = vmatprep.subr.bf16.mxu0 %v1427
    %1777 = vmatpush1.bf16.msra.mxu0 %v1426
    %1778 = vmatprep.subr.bf16.mxu0 %v1487
    %1779 = vmatpush2.bf16.msra.mxu0 %v1486
    %1780 = vmatprep.subr.bf16.mxu0 %v1483
    %1781 = vmatpush2.bf16.msra.mxu0 %v1482
    %1782 = vmatprep.subr.bf16.mxu0 %v1479
    %1783 = vmatpush2.bf16.msra.mxu0 %v1478
    %1784 = vmatprep.subr.bf16.mxu0 %v1475
    %1785 = vmatpush2.bf16.msra.mxu0 %v1474
    %1786 = vmatprep.subr.bf16.mxu0 %v1471
    %1787 = vmatpush2.bf16.msra.mxu0 %v1470
    %1788 = vmatprep.subr.bf16.mxu0 %v1467
    %1789 = vmatpush2.bf16.msra.mxu0 %v1466
    %1790 = vmatprep.subr.bf16.mxu0 %v1463
    %1791 = vmatpush2.bf16.msra.mxu0 %v1462
    %1792 = vmatprep.subr.bf16.mxu0 %v1459
    %1793 = vmatpush2.bf16.msra.mxu0 %v1458
    %1794 = vmatprep.mubr.bf16.mxu0 %v887
    %1795 = vmatmul.mubr.bf16.gmra.mxu0 %v886
    %v1796 = vpop.f32.mrf.mxu0
    %v1797 = vadd.f32 %v1031, %v1796
    %v1798 = vpop.f32.mrf.mxu0
    %v1799 = vadd.f32 %v1035, %v1798
    %v1800 = vpop.f32.mrf.mxu0
    %v1801 = vpop.f32.mrf.mxu0
    %1802 = vdwg.mxu0
    %1803 = vmatprep.subr.bf16.mxu0 %v1519
    %1804 = vmatpush1.bf16.msra.mxu0 %v1518
    %1805 = vmatprep.subr.bf16.mxu0 %v1515
    %1806 = vmatpush1.bf16.msra.mxu0 %v1514
    %1807 = vmatprep.subr.bf16.mxu0 %v1511
    %1808 = vmatpush1.bf16.msra.mxu0 %v1510
    %1809 = vmatprep.subr.bf16.mxu0 %v1507
    %1810 = vmatpush1.bf16.msra.mxu0 %v1506
    %1811 = vmatprep.subr.bf16.mxu0 %v1503
    %1812 = vmatpush1.bf16.msra.mxu0 %v1502
    %1813 = vmatprep.subr.bf16.mxu0 %v1499
    %1814 = vmatpush1.bf16.msra.mxu0 %v1498
    %1815 = vmatprep.subr.bf16.mxu0 %v1495
    %1816 = vmatpush1.bf16.msra.mxu0 %v1494
    %1817 = vmatprep.subr.bf16.mxu0 %v1491
    %1818 = vmatpush1.bf16.msra.mxu0 %v1490
    %1819 = vmatprep.subr.bf16.mxu0 %v1551
    %1820 = vmatpush2.bf16.msra.mxu0 %v1550
    %1821 = vmatprep.subr.bf16.mxu0 %v1547
    %1822 = vmatpush2.bf16.msra.mxu0 %v1546
    %1823 = vmatprep.subr.bf16.mxu0 %v1543
    %1824 = vmatpush2.bf16.msra.mxu0 %v1542
    %1825 = vmatprep.subr.bf16.mxu0 %v1539
    %1826 = vmatpush2.bf16.msra.mxu0 %v1538
    %1827 = vmatprep.subr.bf16.mxu0 %v1535
    %1828 = vmatpush2.bf16.msra.mxu0 %v1534
    %1829 = vmatprep.subr.bf16.mxu0 %v1531
    %1830 = vmatpush2.bf16.msra.mxu0 %v1530
    %1831 = vmatprep.subr.bf16.mxu0 %v1527
    %1832 = vmatpush2.bf16.msra.mxu0 %v1526
    %1833 = vmatprep.subr.bf16.mxu0 %v1523
    %1834 = vmatpush2.bf16.msra.mxu0 %v1522
    %1835 = vmatprep.mubr.bf16.mxu0 %v889
    %1836 = vmatmul.mubr.bf16.gmra.mxu0 %v888
    %v1837 = vpop.f32.mrf.mxu0
    %v1838 = vadd.f32 %v1797, %v1837
    %v1839 = vpop.f32.mrf.mxu0
    %v1840 = vadd.f32 %v1799, %v1839
    %v1841 = vpop.f32.mrf.mxu0
    %v1842 = vpop.f32.mrf.mxu0
    %1843 = vdwg.mxu0
    %v1844 = vmax.f32 %v1756, 0.0
    %v1845 = vmax.f32 %v1758, 0.0
    %v1846 = vmax.f32 %v1838, 0.0
    %v1847 = vmax.f32 %v1840, 0.0
    %v1848 = vpack.c.bf16 %v1844, %v1844
    %v1849 = vpack.c.bf16 %v1845, %v1845
    %v1850 = vpack.c.bf16 %v1846, %v1846
    %v1851 = vpack.c.bf16 %v1847, %v1847
    %v1852 = vld [vmem:[#allocation10] sm:$0xff]
    %v1853 = vld [vmem:[#allocation10 + $0x8] sm:$0xff]
    %v1854 = vld [vmem:[#allocation10 + $0x10] sm:$0xff]
    %v1855 = vld [vmem:[#allocation10 + $0x18] sm:$0xff]
    %v1856 = vld [vmem:[#allocation10 + $0x20] sm:$0xff]
    %v1857 = vld [vmem:[#allocation10 + $0x28] sm:$0xff]
    %v1858 = vld [vmem:[#allocation10 + $0x30] sm:$0xff]
    %v1859 = vld [vmem:[#allocation10 + $0x38] sm:$0xff]
    %v1860 = vld [vmem:[#allocation10 + $0x40] sm:$0xff]
    %v1861 = vld [vmem:[#allocation10 + $0x48] sm:$0xff]
    %v1862 = vld [vmem:[#allocation10 + $0x50] sm:$0xff]
    %v1863 = vld [vmem:[#allocation10 + $0x58] sm:$0xff]
    %v1864 = vld [vmem:[#allocation10 + $0x60] sm:$0xff]
    %v1865 = vld [vmem:[#allocation10 + $0x68] sm:$0xff]
    %v1866 = vld [vmem:[#allocation10 + $0x70] sm:$0xff]
    %v1867 = vld [vmem:[#allocation10 + $0x78] sm:$0xff]
    %v1868 = vld [vmem:[#allocation10 + $0x80] sm:$0xff]
    %v1869 = vld [vmem:[#allocation10 + $0x88] sm:$0xff]
    %v1870 = vld [vmem:[#allocation10 + $0x90] sm:$0xff]
    %v1871 = vld [vmem:[#allocation10 + $0x98] sm:$0xff]
    %v1872 = vld [vmem:[#allocation10 + $0xa0] sm:$0xff]
    %v1873 = vld [vmem:[#allocation10 + $0xa8] sm:$0xff]
    %v1874 = vld [vmem:[#allocation10 + $0xb0] sm:$0xff]
    %v1875 = vld [vmem:[#allocation10 + $0xb8] sm:$0xff]
    %v1876 = vld [vmem:[#allocation10 + $0xc0] sm:$0xff]
    %v1877 = vld [vmem:[#allocation10 + $0xc8] sm:$0xff]
    %v1878 = vld [vmem:[#allocation10 + $0xd0] sm:$0xff]
    %v1879 = vld [vmem:[#allocation10 + $0xd8] sm:$0xff]
    %v1880 = vld [vmem:[#allocation10 + $0xe0] sm:$0xff]
    %v1881 = vld [vmem:[#allocation10 + $0xe8] sm:$0xff]
    %v1882 = vld [vmem:[#allocation10 + $0xf0] sm:$0xff]
    %v1883 = vld [vmem:[#allocation10 + $0xf8] sm:$0xff]
    %v1884 = vld [vmem:[#allocation10 + $0x100] sm:$0xff]
    %v1885 = vld [vmem:[#allocation10 + $0x108] sm:$0xff]
    %v1886 = vld [vmem:[#allocation10 + $0x110] sm:$0xff]
    %v1887 = vld [vmem:[#allocation10 + $0x118] sm:$0xff]
    %v1888 = vld [vmem:[#allocation10 + $0x120] sm:$0xff]
    %v1889 = vld [vmem:[#allocation10 + $0x128] sm:$0xff]
    %v1890 = vld [vmem:[#allocation10 + $0x130] sm:$0xff]
    %v1891 = vld [vmem:[#allocation10 + $0x138] sm:$0xff]
    %v1892 = vld [vmem:[#allocation10 + $0x140] sm:$0xff]
    %v1893 = vld [vmem:[#allocation10 + $0x148] sm:$0xff]
    %v1894 = vld [vmem:[#allocation10 + $0x150] sm:$0xff]
    %v1895 = vld [vmem:[#allocation10 + $0x158] sm:$0xff]
    %v1896 = vld [vmem:[#allocation10 + $0x160] sm:$0xff]
    %v1897 = vld [vmem:[#allocation10 + $0x168] sm:$0xff]
    %v1898 = vld [vmem:[#allocation10 + $0x170] sm:$0xff]
    %v1899 = vld [vmem:[#allocation10 + $0x178] sm:$0xff]
    %v1900 = vld [vmem:[#allocation10 + $0x180] sm:$0xff]
    %v1901 = vld [vmem:[#allocation10 + $0x188] sm:$0xff]
    %v1902 = vld [vmem:[#allocation10 + $0x190] sm:$0xff]
    %v1903 = vld [vmem:[#allocation10 + $0x198] sm:$0xff]
    %v1904 = vld [vmem:[#allocation10 + $0x1a0] sm:$0xff]
    %v1905 = vld [vmem:[#allocation10 + $0x1a8] sm:$0xff]
    %v1906 = vld [vmem:[#allocation10 + $0x1b0] sm:$0xff]
    %v1907 = vld [vmem:[#allocation10 + $0x1b8] sm:$0xff]
    %v1908 = vld [vmem:[#allocation10 + $0x1c0] sm:$0xff]
    %v1909 = vld [vmem:[#allocation10 + $0x1c8] sm:$0xff]
    %v1910 = vld [vmem:[#allocation10 + $0x1d0] sm:$0xff]
    %v1911 = vld [vmem:[#allocation10 + $0x1d8] sm:$0xff]
    %v1912 = vld [vmem:[#allocation10 + $0x1e0] sm:$0xff]
    %v1913 = vld [vmem:[#allocation10 + $0x1e8] sm:$0xff]
    %v1914 = vld [vmem:[#allocation10 + $0x1f0] sm:$0xff]
    %v1915 = vld [vmem:[#allocation10 + $0x1f8] sm:$0xff]
    %v1916 = vld [vmem:[%s6] sm:$0x3]
    %v1918 = vlaneseq
    %v1919 = vshrl.u32 %v1918, 7
    %v1920 = vsub.s32 0, %v1919
    %v1921 = vrot.slane %v1916, %v1920
    %v1922 = vlaneseq
    %v1923 = vshrl.u32 %v1922, 7
    %v1924 = vsub.s32 1, %v1923
    %v1925 = vrot.slane %v1916, %v1924
    %v1992 = vunpack.c.l.b16 %v1852
    %v1993 = vunpack.c.h.b16 %v1852
    %v1994 = vunpack.c.l.b16 %v1853
    %v1995 = vunpack.c.h.b16 %v1853
    %v1996 = vunpack.c.l.b16 %v1854
    %v1997 = vunpack.c.h.b16 %v1854
    %v1998 = vunpack.c.l.b16 %v1855
    %v1999 = vunpack.c.h.b16 %v1855
    %v2000 = vunpack.c.l.b16 %v1856
    %v2001 = vunpack.c.h.b16 %v1856
    %v2002 = vunpack.c.l.b16 %v1857
    %v2003 = vunpack.c.h.b16 %v1857
    %v2004 = vunpack.c.l.b16 %v1858
    %v2005 = vunpack.c.h.b16 %v1858
    %v2006 = vunpack.c.l.b16 %v1859
    %v2007 = vunpack.c.h.b16 %v1859
    %v2008 = vunpack.c.l.b16 %v1860
    %v2009 = vunpack.c.h.b16 %v1860
    %v2010 = vunpack.c.l.b16 %v1861
    %v2011 = vunpack.c.h.b16 %v1861
    %v2012 = vunpack.c.l.b16 %v1862
    %v2013 = vunpack.c.h.b16 %v1862
    %v2014 = vunpack.c.l.b16 %v1863
    %v2015 = vunpack.c.h.b16 %v1863
    %v2016 = vunpack.c.l.b16 %v1864
    %v2017 = vunpack.c.h.b16 %v1864
    %v2018 = vunpack.c.l.b16 %v1865
    %v2019 = vunpack.c.h.b16 %v1865
    %v2020 = vunpack.c.l.b16 %v1866
    %v2021 = vunpack.c.h.b16 %v1866
    %v2022 = vunpack.c.l.b16 %v1867
    %v2023 = vunpack.c.h.b16 %v1867
    %v2024 = vunpack.c.l.b16 %v1868
    %v2025 = vunpack.c.h.b16 %v1868
    %v2026 = vunpack.c.l.b16 %v1869
    %v2027 = vunpack.c.h.b16 %v1869
    %v2028 = vunpack.c.l.b16 %v1870
    %v2029 = vunpack.c.h.b16 %v1870
    %v2030 = vunpack.c.l.b16 %v1871
    %v2031 = vunpack.c.h.b16 %v1871
    %v2032 = vunpack.c.l.b16 %v1872
    %v2033 = vunpack.c.h.b16 %v1872
    %v2034 = vunpack.c.l.b16 %v1873
    %v2035 = vunpack.c.h.b16 %v1873
    %v2036 = vunpack.c.l.b16 %v1874
    %v2037 = vunpack.c.h.b16 %v1874
    %v2038 = vunpack.c.l.b16 %v1875
    %v2039 = vunpack.c.h.b16 %v1875
    %v2040 = vunpack.c.l.b16 %v1876
    %v2041 = vunpack.c.h.b16 %v1876
    %v2042 = vunpack.c.l.b16 %v1877
    %v2043 = vunpack.c.h.b16 %v1877
    %v2044 = vunpack.c.l.b16 %v1878
    %v2045 = vunpack.c.h.b16 %v1878
    %v2046 = vunpack.c.l.b16 %v1879
    %v2047 = vunpack.c.h.b16 %v1879
    %v2048 = vunpack.c.l.b16 %v1880
    %v2049 = vunpack.c.h.b16 %v1880
    %v2050 = vunpack.c.l.b16 %v1881
    %v2051 = vunpack.c.h.b16 %v1881
    %v2052 = vunpack.c.l.b16 %v1882
    %v2053 = vunpack.c.h.b16 %v1882
    %v2054 = vunpack.c.l.b16 %v1883
    %v2055 = vunpack.c.h.b16 %v1883
    %v2056 = vunpack.c.l.b16 %v1884
    %v2057 = vunpack.c.h.b16 %v1884
    %v2058 = vunpack.c.l.b16 %v1885
    %v2059 = vunpack.c.h.b16 %v1885
    %v2060 = vunpack.c.l.b16 %v1886
    %v2061 = vunpack.c.h.b16 %v1886
    %v2062 = vunpack.c.l.b16 %v1887
    %v2063 = vunpack.c.h.b16 %v1887
    %v2064 = vunpack.c.l.b16 %v1888
    %v2065 = vunpack.c.h.b16 %v1888
    %v2066 = vunpack.c.l.b16 %v1889
    %v2067 = vunpack.c.h.b16 %v1889
    %v2068 = vunpack.c.l.b16 %v1890
    %v2069 = vunpack.c.h.b16 %v1890
    %v2070 = vunpack.c.l.b16 %v1891
    %v2071 = vunpack.c.h.b16 %v1891
    %v2072 = vunpack.c.l.b16 %v1892
    %v2073 = vunpack.c.h.b16 %v1892
    %v2074 = vunpack.c.l.b16 %v1893
    %v2075 = vunpack.c.h.b16 %v1893
    %v2076 = vunpack.c.l.b16 %v1894
    %v2077 = vunpack.c.h.b16 %v1894
    %v2078 = vunpack.c.l.b16 %v1895
    %v2079 = vunpack.c.h.b16 %v1895
    %v2080 = vunpack.c.l.b16 %v1896
    %v2081 = vunpack.c.h.b16 %v1896
    %v2082 = vunpack.c.l.b16 %v1897
    %v2083 = vunpack.c.h.b16 %v1897
    %v2084 = vunpack.c.l.b16 %v1898
    %v2085 = vunpack.c.h.b16 %v1898
    %v2086 = vunpack.c.l.b16 %v1899
    %v2087 = vunpack.c.h.b16 %v1899
    %v2088 = vunpack.c.l.b16 %v1900
    %v2089 = vunpack.c.h.b16 %v1900
    %v2090 = vunpack.c.l.b16 %v1901
    %v2091 = vunpack.c.h.b16 %v1901
    %v2092 = vunpack.c.l.b16 %v1902
    %v2093 = vunpack.c.h.b16 %v1902
    %v2094 = vunpack.c.l.b16 %v1903
    %v2095 = vunpack.c.h.b16 %v1903
    %v2096 = vunpack.c.l.b16 %v1904
    %v2097 = vunpack.c.h.b16 %v1904
    %v2098 = vunpack.c.l.b16 %v1905
    %v2099 = vunpack.c.h.b16 %v1905
    %v2100 = vunpack.c.l.b16 %v1906
    %v2101 = vunpack.c.h.b16 %v1906
    %v2102 = vunpack.c.l.b16 %v1907
    %v2103 = vunpack.c.h.b16 %v1907
    %v2104 = vunpack.c.l.b16 %v1908
    %v2105 = vunpack.c.h.b16 %v1908
    %v2106 = vunpack.c.l.b16 %v1909
    %v2107 = vunpack.c.h.b16 %v1909
    %v2108 = vunpack.c.l.b16 %v1910
    %v2109 = vunpack.c.h.b16 %v1910
    %v2110 = vunpack.c.l.b16 %v1911
    %v2111 = vunpack.c.h.b16 %v1911
    %v2112 = vunpack.c.l.b16 %v1912
    %v2113 = vunpack.c.h.b16 %v1912
    %v2114 = vunpack.c.l.b16 %v1913
    %v2115 = vunpack.c.h.b16 %v1913
    %v2116 = vunpack.c.l.b16 %v1914
    %v2117 = vunpack.c.h.b16 %v1914
    %v2118 = vunpack.c.l.b16 %v1915
    %v2119 = vunpack.c.h.b16 %v1915
    %v2120 = vpack.c.b16 %v1994, %v1992
    %v2121 = vpack.c.b16 %v1995, %v1993
    %v2122 = vpack.c.b16 %v1998, %v1996
    %v2123 = vpack.c.b16 %v1999, %v1997
    %v2124 = vpack.c.b16 %v2002, %v2000
    %v2125 = vpack.c.b16 %v2003, %v2001
    %v2126 = vpack.c.b16 %v2006, %v2004
    %v2127 = vpack.c.b16 %v2007, %v2005
    %v2128 = vpack.c.b16 %v2010, %v2008
    %v2129 = vpack.c.b16 %v2011, %v2009
    %v2130 = vpack.c.b16 %v2014, %v2012
    %v2131 = vpack.c.b16 %v2015, %v2013
    %v2132 = vpack.c.b16 %v2018, %v2016
    %v2133 = vpack.c.b16 %v2019, %v2017
    %v2134 = vpack.c.b16 %v2022, %v2020
    %v2135 = vpack.c.b16 %v2023, %v2021
    %v2136 = vpack.c.b16 %v2026, %v2024
    %v2137 = vpack.c.b16 %v2027, %v2025
    %v2138 = vpack.c.b16 %v2030, %v2028
    %v2139 = vpack.c.b16 %v2031, %v2029
    %v2140 = vpack.c.b16 %v2034, %v2032
    %v2141 = vpack.c.b16 %v2035, %v2033
    %v2142 = vpack.c.b16 %v2038, %v2036
    %v2143 = vpack.c.b16 %v2039, %v2037
    %v2144 = vpack.c.b16 %v2042, %v2040
    %v2145 = vpack.c.b16 %v2043, %v2041
    %v2146 = vpack.c.b16 %v2046, %v2044
    %v2147 = vpack.c.b16 %v2047, %v2045
    %v2148 = vpack.c.b16 %v2050, %v2048
    %v2149 = vpack.c.b16 %v2051, %v2049
    %v2150 = vpack.c.b16 %v2054, %v2052
    %v2151 = vpack.c.b16 %v2055, %v2053
    %v2152 = vpack.c.b16 %v2058, %v2056
    %v2153 = vpack.c.b16 %v2059, %v2057
    %v2154 = vpack.c.b16 %v2062, %v2060
    %v2155 = vpack.c.b16 %v2063, %v2061
    %v2156 = vpack.c.b16 %v2066, %v2064
    %v2157 = vpack.c.b16 %v2067, %v2065
    %v2158 = vpack.c.b16 %v2070, %v2068
    %v2159 = vpack.c.b16 %v2071, %v2069
    %v2160 = vpack.c.b16 %v2074, %v2072
    %v2161 = vpack.c.b16 %v2075, %v2073
    %v2162 = vpack.c.b16 %v2078, %v2076
    %v2163 = vpack.c.b16 %v2079, %v2077
    %v2164 = vpack.c.b16 %v2082, %v2080
    %v2165 = vpack.c.b16 %v2083, %v2081
    %v2166 = vpack.c.b16 %v2086, %v2084
    %v2167 = vpack.c.b16 %v2087, %v2085
    %v2168 = vpack.c.b16 %v2090, %v2088
    %v2169 = vpack.c.b16 %v2091, %v2089
    %v2170 = vpack.c.b16 %v2094, %v2092
    %v2171 = vpack.c.b16 %v2095, %v2093
    %v2172 = vpack.c.b16 %v2098, %v2096
    %v2173 = vpack.c.b16 %v2099, %v2097
    %v2174 = vpack.c.b16 %v2102, %v2100
    %v2175 = vpack.c.b16 %v2103, %v2101
    %v2176 = vpack.c.b16 %v2106, %v2104
    %v2177 = vpack.c.b16 %v2107, %v2105
    %v2178 = vpack.c.b16 %v2110, %v2108
    %v2179 = vpack.c.b16 %v2111, %v2109
    %v2180 = vpack.c.b16 %v2114, %v2112
    %v2181 = vpack.c.b16 %v2115, %v2113
    %v2182 = vpack.c.b16 %v2118, %v2116
    %v2183 = vpack.c.b16 %v2119, %v2117
    %2248 = vmatprep.subr.bf16.mxu0 %v2135
    %2249 = vmatpush1.bf16.msra.mxu0 %v2134
    %2250 = vmatprep.subr.bf16.mxu0 %v2133
    %2251 = vmatpush1.bf16.msra.mxu0 %v2132
    %2252 = vmatprep.subr.bf16.mxu0 %v2131
    %2253 = vmatpush1.bf16.msra.mxu0 %v2130
    %2254 = vmatprep.subr.bf16.mxu0 %v2129
    %2255 = vmatpush1.bf16.msra.mxu0 %v2128
    %2256 = vmatprep.subr.bf16.mxu0 %v2127
    %2257 = vmatpush1.bf16.msra.mxu0 %v2126
    %2258 = vmatprep.subr.bf16.mxu0 %v2125
    %2259 = vmatpush1.bf16.msra.mxu0 %v2124
    %2260 = vmatprep.subr.bf16.mxu0 %v2123
    %2261 = vmatpush1.bf16.msra.mxu0 %v2122
    %2262 = vmatprep.subr.bf16.mxu0 %v2121
    %2263 = vmatpush1.bf16.msra.mxu0 %v2120
    %2264 = vmatprep.subr.bf16.mxu0 %v2151
    %2265 = vmatpush2.bf16.msra.mxu0 %v2150
    %2266 = vmatprep.subr.bf16.mxu0 %v2149
    %2267 = vmatpush2.bf16.msra.mxu0 %v2148
    %2268 = vmatprep.subr.bf16.mxu0 %v2147
    %2269 = vmatpush2.bf16.msra.mxu0 %v2146
    %2270 = vmatprep.subr.bf16.mxu0 %v2145
    %2271 = vmatpush2.bf16.msra.mxu0 %v2144
    %2272 = vmatprep.subr.bf16.mxu0 %v2143
    %2273 = vmatpush2.bf16.msra.mxu0 %v2142
    %2274 = vmatprep.subr.bf16.mxu0 %v2141
    %2275 = vmatpush2.bf16.msra.mxu0 %v2140
    %2276 = vmatprep.subr.bf16.mxu0 %v2139
    %2277 = vmatpush2.bf16.msra.mxu0 %v2138
    %2278 = vmatprep.subr.bf16.mxu0 %v2137
    %2279 = vmatpush2.bf16.msra.mxu0 %v2136
    %2280 = vmatprep.mubr.bf16.mxu0 %v1849
    %2281 = vmatmul.mubr.bf16.gmra.mxu0 %v1848
    %v2282 = vpop.f32.mrf.mxu0
    %v2283 = vadd.f32 %v1921, %v2282
    %v2284 = vpop.f32.mrf.mxu0
    %v2285 = vadd.f32 %v1925, %v2284
    %v2286 = vpop.f32.mrf.mxu0
    %v2287 = vpop.f32.mrf.mxu0
    %2288 = vdwg.mxu0
    %2289 = vmatprep.subr.bf16.mxu0 %v2167
    %2290 = vmatpush1.bf16.msra.mxu0 %v2166
    %2291 = vmatprep.subr.bf16.mxu0 %v2165
    %2292 = vmatpush1.bf16.msra.mxu0 %v2164
    %2293 = vmatprep.subr.bf16.mxu0 %v2163
    %2294 = vmatpush1.bf16.msra.mxu0 %v2162
    %2295 = vmatprep.subr.bf16.mxu0 %v2161
    %2296 = vmatpush1.bf16.msra.mxu0 %v2160
    %2297 = vmatprep.subr.bf16.mxu0 %v2159
    %2298 = vmatpush1.bf16.msra.mxu0 %v2158
    %2299 = vmatprep.subr.bf16.mxu0 %v2157
    %2300 = vmatpush1.bf16.msra.mxu0 %v2156
    %2301 = vmatprep.subr.bf16.mxu0 %v2155
    %2302 = vmatpush1.bf16.msra.mxu0 %v2154
    %2303 = vmatprep.subr.bf16.mxu0 %v2153
    %2304 = vmatpush1.bf16.msra.mxu0 %v2152
    %2305 = vmatprep.subr.bf16.mxu0 %v2183
    %2306 = vmatpush2.bf16.msra.mxu0 %v2182
    %2307 = vmatprep.subr.bf16.mxu0 %v2181
    %2308 = vmatpush2.bf16.msra.mxu0 %v2180
    %2309 = vmatprep.subr.bf16.mxu0 %v2179
    %2310 = vmatpush2.bf16.msra.mxu0 %v2178
    %2311 = vmatprep.subr.bf16.mxu0 %v2177
    %2312 = vmatpush2.bf16.msra.mxu0 %v2176
    %2313 = vmatprep.subr.bf16.mxu0 %v2175
    %2314 = vmatpush2.bf16.msra.mxu0 %v2174
    %2315 = vmatprep.subr.bf16.mxu0 %v2173
    %2316 = vmatpush2.bf16.msra.mxu0 %v2172
    %2317 = vmatprep.subr.bf16.mxu0 %v2171
    %2318 = vmatpush2.bf16.msra.mxu0 %v2170
    %2319 = vmatprep.subr.bf16.mxu0 %v2169
    %2320 = vmatpush2.bf16.msra.mxu0 %v2168
    %2321 = vmatprep.mubr.bf16.mxu0 %v1851
    %2322 = vmatmul.mubr.bf16.gmra.mxu0 %v1850
    %v2323 = vpop.f32.mrf.mxu0
    %v2324 = vadd.f32 %v2283, %v2323
    %v2325 = vpop.f32.mrf.mxu0
    %v2326 = vadd.f32 %v2285, %v2325
    %v2327 = vpop.f32.mrf.mxu0
    %v2328 = vpop.f32.mrf.mxu0
    %2329 = vdwg.mxu0
    %v2330 = vmax.f32 %v2324, 0.0
    %v2331 = vmax.f32 %v2326, 0.0
    %v2332 = vpack.c.bf16 %v2330, %v2330
    %v2333 = vpack.c.bf16 %v2331, %v2331
    %v2334 = vld [vmem:[#allocation11] sm:$0xf]
    %v2335 = vld [vmem:[#allocation11 + $0x4] sm:$0xf]
    %v2336 = vld [vmem:[#allocation11 + $0x8] sm:$0xf]
    %v2337 = vld [vmem:[#allocation11 + $0xc] sm:$0xf]
    %v2338 = vld [vmem:[#allocation11 + $0x10] sm:$0xf]
    %v2339 = vld [vmem:[#allocation11 + $0x14] sm:$0xf]
    %v2340 = vld [vmem:[#allocation11 + $0x18] sm:$0xf]
    %v2341 = vld [vmem:[#allocation11 + $0x1c] sm:$0xf]
    %v2342 = vld [vmem:[#allocation11 + $0x20] sm:$0xf]
    %v2343 = vld [vmem:[#allocation11 + $0x24] sm:$0xf]
    %v2344 = vld [vmem:[#allocation11 + $0x28] sm:$0xf]
    %v2345 = vld [vmem:[#allocation11 + $0x2c] sm:$0xf]
    %v2346 = vld [vmem:[#allocation11 + $0x30] sm:$0xf]
    %v2347 = vld [vmem:[#allocation11 + $0x34] sm:$0xf]
    %v2348 = vld [vmem:[#allocation11 + $0x38] sm:$0xf]
    %v2349 = vld [vmem:[#allocation11 + $0x3c] sm:$0xf]
    %v2350 = vld [vmem:[#allocation11 + $0x40] sm:$0xf]
    %v2351 = vld [vmem:[#allocation11 + $0x44] sm:$0xf]
    %v2352 = vld [vmem:[#allocation11 + $0x48] sm:$0xf]
    %v2353 = vld [vmem:[#allocation11 + $0x4c] sm:$0xf]
    %v2354 = vld [vmem:[#allocation11 + $0x50] sm:$0xf]
    %v2355 = vld [vmem:[#allocation11 + $0x54] sm:$0xf]
    %v2356 = vld [vmem:[#allocation11 + $0x58] sm:$0xf]
    %v2357 = vld [vmem:[#allocation11 + $0x5c] sm:$0xf]
    %v2358 = vld [vmem:[#allocation11 + $0x60] sm:$0xf]
    %v2359 = vld [vmem:[#allocation11 + $0x64] sm:$0xf]
    %v2360 = vld [vmem:[#allocation11 + $0x68] sm:$0xf]
    %v2361 = vld [vmem:[#allocation11 + $0x6c] sm:$0xf]
    %v2362 = vld [vmem:[#allocation11 + $0x70] sm:$0xf]
    %v2363 = vld [vmem:[#allocation11 + $0x74] sm:$0xf]
    %v2364 = vld [vmem:[#allocation11 + $0x78] sm:$0xf]
    %v2365 = vld [vmem:[#allocation11 + $0x7c] sm:$0xf]
    %v2366 = vld [vmem:[%s8] sm:$0x1]
    %v2368 = vlaneseq
    %v2369 = vshrl.u32 %v2368, 7
    %v2370 = vsub.s32 0, %v2369
    %v2371 = vrot.slane %v2366, %v2370
    %v2405 = vunpack.c.l.b16 %v2334
    %v2406 = vunpack.c.l.b16 %v2335
    %v2407 = vunpack.c.l.b16 %v2336
    %v2408 = vunpack.c.l.b16 %v2337
    %v2409 = vunpack.c.l.b16 %v2338
    %v2410 = vunpack.c.l.b16 %v2339
    %v2411 = vunpack.c.l.b16 %v2340
    %v2412 = vunpack.c.l.b16 %v2341
    %v2413 = vunpack.c.l.b16 %v2342
    %v2414 = vunpack.c.l.b16 %v2343
    %v2415 = vunpack.c.l.b16 %v2344
    %v2416 = vunpack.c.l.b16 %v2345
    %v2417 = vunpack.c.l.b16 %v2346
    %v2418 = vunpack.c.l.b16 %v2347
    %v2419 = vunpack.c.l.b16 %v2348
    %v2420 = vunpack.c.l.b16 %v2349
    %v2421 = vunpack.c.l.b16 %v2350
    %v2422 = vunpack.c.l.b16 %v2351
    %v2423 = vunpack.c.l.b16 %v2352
    %v2424 = vunpack.c.l.b16 %v2353
    %v2425 = vunpack.c.l.b16 %v2354
    %v2426 = vunpack.c.l.b16 %v2355
    %v2427 = vunpack.c.l.b16 %v2356
    %v2428 = vunpack.c.l.b16 %v2357
    %v2429 = vunpack.c.l.b16 %v2358
    %v2430 = vunpack.c.l.b16 %v2359
    %v2431 = vunpack.c.l.b16 %v2360
    %v2432 = vunpack.c.l.b16 %v2361
    %v2433 = vunpack.c.l.b16 %v2362
    %v2434 = vunpack.c.l.b16 %v2363
    %v2435 = vunpack.c.l.b16 %v2364
    %v2436 = vunpack.c.l.b16 %v2365
    %v2437 = vpack.c.b16 %v2406, %v2405
    %v2438 = vpack.c.b16 %v2408, %v2407
    %v2439 = vpack.c.b16 %v2410, %v2409
    %v2440 = vpack.c.b16 %v2412, %v2411
    %v2441 = vpack.c.b16 %v2414, %v2413
    %v2442 = vpack.c.b16 %v2416, %v2415
    %v2443 = vpack.c.b16 %v2418, %v2417
    %v2444 = vpack.c.b16 %v2420, %v2419
    %v2445 = vpack.c.b16 %v2422, %v2421
    %v2446 = vpack.c.b16 %v2424, %v2423
    %v2447 = vpack.c.b16 %v2426, %v2425
    %v2448 = vpack.c.b16 %v2428, %v2427
    %v2449 = vpack.c.b16 %v2430, %v2429
    %v2450 = vpack.c.b16 %v2432, %v2431
    %v2451 = vpack.c.b16 %v2434, %v2433
    %v2452 = vpack.c.b16 %v2436, %v2435
    %2469 = vmatprep.subr.bf16.mxu0 0
    %2470 = vmatpush1.bf16.msra.mxu0 %v2444
    %2471 = vmatprep.subr.bf16.mxu0 0
    %2472 = vmatpush1.bf16.msra.mxu0 %v2443
    %2473 = vmatprep.subr.bf16.mxu0 0
    %2474 = vmatpush1.bf16.msra.mxu0 %v2442
    %2475 = vmatprep.subr.bf16.mxu0 0
    %2476 = vmatpush1.bf16.msra.mxu0 %v2441
    %2477 = vmatprep.subr.bf16.mxu0 0
    %2478 = vmatpush1.bf16.msra.mxu0 %v2440
    %2479 = vmatprep.subr.bf16.mxu0 0
    %2480 = vmatpush1.bf16.msra.mxu0 %v2439
    %2481 = vmatprep.subr.bf16.mxu0 0
    %2482 = vmatpush1.bf16.msra.mxu0 %v2438
    %2483 = vmatprep.subr.bf16.mxu0 0
    %2484 = vmatpush1.bf16.msra.mxu0 %v2437
    %2485 = vmatprep.subr.bf16.mxu0 0
    %2486 = vmatpush2.bf16.msra.mxu0 %v2452
    %2487 = vmatprep.subr.bf16.mxu0 0
    %2488 = vmatpush2.bf16.msra.mxu0 %v2451
    %2489 = vmatprep.subr.bf16.mxu0 0
    %2490 = vmatpush2.bf16.msra.mxu0 %v2450
    %2491 = vmatprep.subr.bf16.mxu0 0
    %2492 = vmatpush2.bf16.msra.mxu0 %v2449
    %2493 = vmatprep.subr.bf16.mxu0 0
    %2494 = vmatpush2.bf16.msra.mxu0 %v2448
    %2495 = vmatprep.subr.bf16.mxu0 0
    %2496 = vmatpush2.bf16.msra.mxu0 %v2447
    %2497 = vmatprep.subr.bf16.mxu0 0
    %2498 = vmatpush2.bf16.msra.mxu0 %v2446
    %2499 = vmatprep.subr.bf16.mxu0 0
    %2500 = vmatpush2.bf16.msra.mxu0 %v2445
    %2501 = vmatprep.mubr.bf16.mxu0 %v2333
    %2502 = vmatmul.mubr.bf16.gmra.mxu0 %v2332
    %v2503 = vpop.f32.mrf.mxu0
    %v2504 = vadd.f32 %v2371, %v2503
    %v2505 = vpop.f32.mrf.mxu0
    %v2506 = vpop.f32.mrf.mxu0
    %v2507 = vpop.f32.mrf.mxu0
    %2508 = vdwg.mxu0
    %v2509 = vmax.f32 %v2504, 0.0
    %v2510 = vpack.c.bf16 %v2509, %v2509
    %v2511 = vld [vmem:[#allocation13] sm:$0xf]
    %v2512 = vld [vmem:[#allocation13 + $0x4] sm:$0xf]
    %v2513 = vld [vmem:[#allocation13 + $0x8] sm:$0xf]
    %v2514 = vld [vmem:[#allocation13 + $0xc] sm:$0xf]
    %v2515 = vld [vmem:[#allocation13 + $0x10] sm:$0xf]
    %v2516 = vld [vmem:[#allocation13 + $0x14] sm:$0xf]
    %v2517 = vld [vmem:[#allocation13 + $0x18] sm:$0xf]
    %v2518 = vld [vmem:[#allocation13 + $0x1c] sm:$0xf]
    %v2519 = vld [vmem:[#allocation13 + $0x20] sm:$0xf]
    %v2520 = vld [vmem:[#allocation13 + $0x24] sm:$0xf]
    %v2521 = vld [vmem:[#allocation13 + $0x28] sm:$0xf]
    %v2522 = vld [vmem:[#allocation13 + $0x2c] sm:$0xf]
    %v2523 = vld [vmem:[#allocation13 + $0x30] sm:$0xf]
    %v2524 = vld [vmem:[#allocation13 + $0x34] sm:$0xf]
    %v2525 = vld [vmem:[#allocation13 + $0x38] sm:$0xf]
    %v2526 = vld [vmem:[#allocation13 + $0x3c] sm:$0xf]
    %v2527 = vld [vmem:[%s10] sm:$0x1]
    %v2529 = vlaneseq
    %v2530 = vshrl.u32 %v2529, 7
    %v2531 = vsub.s32 0, %v2530
    %v2532 = vrot.slane %v2527, %v2531
    %v2550 = vunpack.c.l.b16 %v2511
    %v2551 = vunpack.c.l.b16 %v2512
    %v2552 = vunpack.c.l.b16 %v2513
    %v2553 = vunpack.c.l.b16 %v2514
    %v2554 = vunpack.c.l.b16 %v2515
    %v2555 = vunpack.c.l.b16 %v2516
    %v2556 = vunpack.c.l.b16 %v2517
    %v2557 = vunpack.c.l.b16 %v2518
    %v2558 = vunpack.c.l.b16 %v2519
    %v2559 = vunpack.c.l.b16 %v2520
    %v2560 = vunpack.c.l.b16 %v2521
    %v2561 = vunpack.c.l.b16 %v2522
    %v2562 = vunpack.c.l.b16 %v2523
    %v2563 = vunpack.c.l.b16 %v2524
    %v2564 = vunpack.c.l.b16 %v2525
    %v2565 = vunpack.c.l.b16 %v2526
    %v2566 = vpack.c.b16 %v2551, %v2550
    %v2567 = vpack.c.b16 %v2553, %v2552
    %v2568 = vpack.c.b16 %v2555, %v2554
    %v2569 = vpack.c.b16 %v2557, %v2556
    %v2570 = vpack.c.b16 %v2559, %v2558
    %v2571 = vpack.c.b16 %v2561, %v2560
    %v2572 = vpack.c.b16 %v2563, %v2562
    %v2573 = vpack.c.b16 %v2565, %v2564
    %2582 = vmatprep.subr.bf16.mxu0 0
    %2583 = vmatpush1.bf16.msra.mxu0 %v2573
    %2584 = vmatprep.subr.bf16.mxu0 0
    %2585 = vmatpush1.bf16.msra.mxu0 %v2572
    %2586 = vmatprep.subr.bf16.mxu0 0
    %2587 = vmatpush1.bf16.msra.mxu0 %v2571
    %2588 = vmatprep.subr.bf16.mxu0 0
    %2589 = vmatpush1.bf16.msra.mxu0 %v2570
    %2590 = vmatprep.subr.bf16.mxu0 0
    %2591 = vmatpush1.bf16.msra.mxu0 %v2569
    %2592 = vmatprep.subr.bf16.mxu0 0
    %2593 = vmatpush1.bf16.msra.mxu0 %v2568
    %2594 = vmatprep.subr.bf16.mxu0 0
    %2595 = vmatpush1.bf16.msra.mxu0 %v2567
    %2596 = vmatprep.subr.bf16.mxu0 0
    %2597 = vmatpush1.bf16.msra.mxu0 %v2566
    %2598 = vmatprep.subr.bf16.mxu0 0
    %2599 = vmatpush2.bf16.msra.mxu0 0
    %2600 = vmatprep.subr.bf16.mxu0 0
    %2601 = vmatpush2.bf16.msra.mxu0 0
    %2602 = vmatprep.subr.bf16.mxu0 0
    %2603 = vmatpush2.bf16.msra.mxu0 0
    %2604 = vmatprep.subr.bf16.mxu0 0
    %2605 = vmatpush2.bf16.msra.mxu0 0
    %2606 = vmatprep.subr.bf16.mxu0 0
    %2607 = vmatpush2.bf16.msra.mxu0 0
    %2608 = vmatprep.subr.bf16.mxu0 0
    %2609 = vmatpush2.bf16.msra.mxu0 0
    %2610 = vmatprep.subr.bf16.mxu0 0
    %2611 = vmatpush2.bf16.msra.mxu0 0
    %2612 = vmatprep.subr.bf16.mxu0 0
    %2613 = vmatpush2.bf16.msra.mxu0 0
    %2614 = vmatprep.mubr.bf16.mxu0 0
    %2615 = vmatmul.mubr.bf16.gmra.mxu0 %v2510
    %v2616 = vpop.f32.mrf.mxu0
    %v2617 = vadd.f32 %v2532, %v2616
    %v2618 = vpop.f32.mrf.mxu0
    %v2619 = vpop.f32.mrf.mxu0
    %v2620 = vpop.f32.mrf.mxu0
    %2621 = vdwg.mxu0
    %2622 = vst [vmem:[#allocation14] sm:$0xf] %v2617
    // Predicated region
    $region74: #{tpu_custom_call.1} parent=1 // pred_check
      _
    $region75: #{tpu_custom_call.1} parent=1 // pred_check_branch
      %2624 = sbr.rel (0) target = $region77
    $region76: #{tpu_custom_call.1} parent=1 // pred_region
      %s2626 = ssub.s32 64, 64
      %2627 = vsyncadd [#allocation4], %s2626
      %s2629 = sshll.u32 [#allocation14], 4
      %s2630 = int_to_ptr.vmem [resolvable:$true] %s2629
      %2632 = dma.vmem_to_hbm [thread:$0]  %s2630, 64, %s11, [#allocation4]
    $region77: #{tpu_custom_call.1} parent=1 // pred_fallthru
      _
    // Predicated region
    $region78: #{tpu_custom_call.1} parent=1 // pred_check
      _
    $region79: #{tpu_custom_call.1} parent=1 // pred_check_branch
      %2634 = sbr.rel (0) target = $region81
    $region80: #{tpu_custom_call.1} parent=1 // pred_region
      %2635 = dma.done [#allocation4], 64
    $region81: #{tpu_custom_call.1} parent=1 // pred_fallthru
      _
    %2636 = vsyncpa [#allocation3], 1
    %2637 = vsyncpa [#allocation6], 1
    %2638 = vsyncpa [#allocation9], 1
    %2639 = vsyncpa [#allocation12], 1
    %2640 = vsyncpa [#allocation4], 1

</llo_original>
